<compile_context>
chip_gen: v6e
topology: v6e:2x2x1
jax: 0.10.0
libtpu: 0.0.40
codegen_flags: <defaults>
</compile_context>

<pallas_src>
import jax
import jax.numpy as jnp
import numpy as np
from jax.experimental import pallas as pl
from jax.experimental.pallas import tpu as pltpu


def _round_up(x, m):
    return ((x + m - 1) // m) * m


# ----------------------------------------------------------------------------
# Fused Pallas kernel: grid = (num_layer,), state carried in VMEM scratch.
# ----------------------------------------------------------------------------
def fused_encoder_kernel(
        # constant-across-layers inputs
        x0_ref, vfeat0_ref, src_oh_ref, dst_ohT_ref, batch_oh_ref, pool_oh_ref,
        # per-layer (stacked [L, ...]) inputs, sliced by the grid index
        ope_ref, eemb_ref, w1_ref, b1_ref, s1_ref, t1_ref,
        w2_ref, b2_ref, obn_s_ref, obn_t_ref,
        # virtual-node MLP params (shared across layers)
        vw1_ref, vb1_ref, vs1_ref, vt1_ref, vw2_ref, vb2_ref, vs2_ref, vt2_ref,
        # output + carried scratch
        out_ref, h_scr, v_scr):
    l = pl.program_id(0)
    L = pl.num_programs(0)
    f32 = jnp.float32
    bf16 = jnp.bfloat16

    @pl.when(l == 0)
    def _init():
        h_scr[...] = x0_ref[...]
        v_scr[...] = vfeat0_ref[...]

    # post_conv += virtual_node_feat[batch]  (only for layers >= 1)
    vadd = jnp.dot(batch_oh_ref[...], v_scr[...], preferred_element_type=f32)
    h_in = h_scr[...] + jnp.where(l > 0, vadd, 0.0)

    # --- GINEConv -----------------------------------------------------------
    # gather x_j per edge:   [E, N](bf16 one-hot) @ [N, Dp](bf16) -> f32
    x_j = jnp.dot(src_oh_ref[...], h_in.astype(bf16), preferred_element_type=f32)
    msgs = jnp.maximum(x_j + eemb_ref[...], 0.0)                        # [E, Dp]
    # scatter-add to targets: [N, E](bf16 one-hot) @ [E, Dp](bf16) -> f32
    aggr = jnp.dot(dst_ohT_ref[...], msgs.astype(bf16), preferred_element_type=f32)
    pre = ope_ref[...] * h_in + aggr                                    # (1+eps)*x + aggr

    # GINE mlp: Linear(D,2D) -> BatchNorm1d(eval) -> ReLU -> Linear(2D,D)
    h1 = jnp.dot(pre, w1_ref[...], preferred_element_type=f32) + b1_ref[...]
    h1 = jnp.maximum(h1 * s1_ref[...] + t1_ref[...], 0.0)               # [N, Hp]
    conv = jnp.dot(h1, w2_ref[...], preferred_element_type=f32) + b2_ref[...]

    # outer BatchNorm1d (eval) + ReLU on all but the last layer; dropout = id
    post = conv * obn_s_ref[...] + obn_t_ref[...]
    post = jnp.where(l < L - 1, jnp.maximum(post, 0.0), post)

    h_scr[...] = post
    out_ref[...] = post

    # virtual-node update after layers 1 .. L-2:
    #   vfeat = virtual_mlp(global_add_pool(post, batch) + vfeat)
    @pl.when(jnp.logical_and(l >= 1, l < L - 1))
    def _update_virtual():
        pooled = jnp.dot(pool_oh_ref[...], post,
                         preferred_element_type=f32) + v_scr[...]       # [G, Dp]
        a = jnp.dot(pooled, vw1_ref[...], preferred_element_type=f32) + vb1_ref[...]
        a = jnp.maximum(a * vs1_ref[...] + vt1_ref[...], 0.0)
        b = jnp.dot(a, vw2_ref[...], preferred_element_type=f32) + vb2_ref[...]
        b = jnp.maximum(b * vs2_ref[...] + vt2_ref[...], 0.0)
        v_scr[...] = b


# ----------------------------------------------------------------------------
# Wrapper: pad to lane-dense layout, stack per-layer params, one pallas_call.
# ----------------------------------------------------------------------------
def _pad_to(a, shape):
    return jnp.pad(a, [(0, t - s) for s, t in zip(a.shape, shape)])


def _stack_pad(arrs, shape):
    return jnp.stack([_pad_to(a, shape) for a in arrs])


def _full_spec(a):
    nd = a.ndim
    return pl.BlockSpec(tuple(a.shape), lambda l: (0,) * nd)


def _layer_spec(a):
    nd = a.ndim
    return pl.BlockSpec((None,) + tuple(a.shape[1:]),
                        lambda l: (l,) + (0,) * (nd - 1))


def bond_encode(edge_attr, tables):
    # BondEncoder: sum of per-feature embedding lookups -> [E, emb_dim]
    return sum(tables[k][edge_attr[:, k]] for k in range(len(tables)))


def encoder_forward_pallas(x, edge_index, edge_attr, batch, params, num_layer):
    N, D = x.shape
    E = edge_index.shape[1]
    G = int(batch[-1]) + 1
    L = num_layer
    Dp = _round_up(D, 128)        # lane-dense feature dim
    Hp = _round_up(2 * D, 128)    # lane-dense hidden dim of the GINE / virtual MLPs

    layers = params["layers"]
    vp = params["vmlp"]

    # ---- constant-across-layers operands ----
    x0 = _pad_to(x, (N, Dp))
    vfeat0 = jnp.broadcast_to(_pad_to(params["v_emb"], (1, Dp)), (G, Dp))
    # gather matrix [E, N]; bf16 is exact for one-hot 0/1 values
    src_oh = jax.nn.one_hot(edge_index[0], N, dtype=jnp.bfloat16)
    # scatter matrix built DIRECTLY in [N, E] layout (no [E, N] copy + transpose)
    dst_ohT = (jnp.arange(N, dtype=edge_index.dtype)[:, None]
               == edge_index[1][None, :]).astype(jnp.bfloat16)
    batch_oh = jax.nn.one_hot(batch, G, dtype=jnp.float32)              # [N, G]
    pool_oh = (jnp.arange(G, dtype=batch.dtype)[:, None]
               == batch[None, :]).astype(jnp.float32)                   # [G, N]

    # ---- stacked per-layer operands (streamed one layer slice at a time) ----
    ope = _stack_pad([jnp.full((1, D), 1.0 + lp["eps"], jnp.float32) for lp in layers], (1, Dp))
    eemb = _stack_pad([bond_encode(edge_attr, lp["bond"]) for lp in layers], (E, Dp))
    w1 = _stack_pad([lp["w1"] for lp in layers], (Dp, Hp))
    b1 = _stack_pad([lp["b1"] for lp in layers], (1, Hp))
    s1 = _stack_pad([lp["s1"] for lp in layers], (1, Hp))
    t1 = _stack_pad([lp["t1"] for lp in layers], (1, Hp))
    w2 = _stack_pad([lp["w2"] for lp in layers], (Hp, Dp))
    b2 = _stack_pad([lp["b2"] for lp in layers], (1, Dp))
    obn_s = _stack_pad([lp["obn_s"] for lp in layers], (1, Dp))
    obn_t = _stack_pad([lp["obn_t"] for lp in layers], (1, Dp))

    # ---- virtual-node MLP params (shared) ----
    vw1 = _pad_to(vp["w1"], (Dp, Hp)); vb1 = _pad_to(vp["b1"], (1, Hp))
    vs1 = _pad_to(vp["s1"], (1, Hp)); vt1 = _pad_to(vp["t1"], (1, Hp))
    vw2 = _pad_to(vp["w2"], (Hp, Dp)); vb2 = _pad_to(vp["b2"], (1, Dp))
    vs2 = _pad_to(vp["s2"], (1, Dp)); vt2 = _pad_to(vp["t2"], (1, Dp))

    const_ops = [x0, vfeat0, src_oh, dst_ohT, batch_oh, pool_oh]
    layer_ops = [ope, eemb, w1, b1, s1, t1, w2, b2, obn_s, obn_t]
    vmlp_ops = [vw1, vb1, vs1, vt1, vw2, vb2, vs2, vt2]
    operands = const_ops + layer_ops + vmlp_ops

    in_specs = ([_full_spec(a) for a in const_ops]
                + [_layer_spec(a) for a in layer_ops]
                + [_full_spec(a) for a in vmlp_ops])

    # advisory cost estimate
    flops_layer = 2 * E * N * Dp * 2 + 2 * N * Dp * Hp + 2 * N * Hp * Dp + 2 * N * G * Dp
    flops_vmlp = 2 * G * N * Dp + 2 * G * Dp * Hp + 2 * G * Hp * Dp
    flops = L * flops_layer + max(L - 2, 0) * flops_vmlp
    bytes_accessed = sum(int(a.size) * a.dtype.itemsize for a in operands) + N * Dp * 4

    out = pl.pallas_call(
        fused_encoder_kernel,
        out_shape=jax.ShapeDtypeStruct((N, Dp), jnp.float32),
        grid_spec=pltpu.PrefetchScalarGridSpec(
            num_scalar_prefetch=0,
            grid=(L,),
            in_specs=in_specs,
            out_specs=pl.BlockSpec((N, Dp), lambda l: (0, 0)),
            scratch_shapes=[pltpu.VMEM((N, Dp), jnp.float32),     # node features carry
                            pltpu.VMEM((G, Dp), jnp.float32)],    # virtual-node carry
        ),
        compiler_params=pltpu.CompilerParams(
            # the layer axis carries state in scratch -> must run sequentially
            dimension_semantics=("arbitrary",),
            vmem_limit_bytes=32 * 1024 * 1024,
        ),
        cost_estimate=pl.CostEstimate(flops=int(flops), transcendentals=0,
                                      bytes_accessed=int(bytes_accessed)),
    )(*operands)
    return out[:, :D]


# ----------------------------------------------------------------------------
# Pure-JAX reference (f32, unpadded) for verification
# ----------------------------------------------------------------------------
def encoder_forward_ref(x, edge_index, edge_attr, batch, params, num_layer):
    N, D = x.shape
    G = int(batch[-1]) + 1
    src, dst = edge_index[0], edge_index[1]
    vfeat = jnp.broadcast_to(params["v_emb"], (G, D))

    def gine_layer(x_in, lp, apply_relu):
        eemb = bond_encode(edge_attr, lp["bond"])
        msgs = jnp.maximum(x_in[src] + eemb, 0.0)
        aggr = jnp.zeros_like(x_in).at[dst].add(msgs)
        pre = (1.0 + lp["eps"]) * x_in + aggr
        h = jnp.maximum((pre @ lp["w1"] + lp["b1"]) * lp["s1"] + lp["t1"], 0.0)
        post = (h @ lp["w2"] + lp["b2"]) * lp["obn_s"] + lp["obn_t"]
        return jnp.maximum(post, 0.0) if apply_relu else post

    def virtual_mlp(post, vfeat_in):
        vp = params["vmlp"]
        pooled = jnp.zeros((G, D), post.dtype).at[batch].add(post) + vfeat_in
        a = jnp.maximum((pooled @ vp["w1"] + vp["b1"]) * vp["s1"] + vp["t1"], 0.0)
        return jnp.maximum((a @ vp["w2"] + vp["b2"]) * vp["s2"] + vp["t2"], 0.0)

    post_conv = gine_layer(x, params["layers"][0], apply_relu=(num_layer > 1))
    n_rest = num_layer - 1
    for i in range(n_rest):
        post_conv = post_conv + vfeat[batch]
        post_conv = gine_layer(post_conv, params["layers"][i + 1],
                               apply_relu=(i != n_rest - 1))
        if i < n_rest - 1:
            vfeat = virtual_mlp(post_conv, vfeat)
    return post_conv


# ----------------------------------------------------------------------------
# Parameter initialization (deterministic, matches module __init__ shapes)
# ----------------------------------------------------------------------------
def init_params(key, num_layer, emb_dim, bond_vocab=(5, 6, 2)):
    keys = iter(jax.random.split(key, 512))

    def nrm(shape, scale=0.1):
        return scale * jax.random.normal(next(keys), shape, jnp.float32)

    def bn_affine(dim):
        # eval-mode BatchNorm1d folded to per-channel affine
        gamma = jax.random.uniform(next(keys), (1, dim), jnp.float32, 0.5, 1.5)
        beta = nrm((1, dim))
        rmean = nrm((1, dim))
        rvar = jax.random.uniform(next(keys), (1, dim), jnp.float32, 0.5, 1.5)
        scale = gamma / jnp.sqrt(rvar + 1e-5)
        shift = beta - rmean * scale
        return scale, shift

    layers = []
    for _ in range(num_layer):                      # conv1 + convs, batch_norm1 + batch_norms
        s1, t1 = bn_affine(2 * emb_dim)             # BN inside GINE mlp
        obn_s, obn_t = bn_affine(emb_dim)           # outer BatchNorm1d(emb_dim)
        layers.append(dict(
            eps=0.1,                                # GINE eps parameter (torch inits to 0)
            bond=[nrm((v, emb_dim)) for v in bond_vocab],   # BondEncoder tables
            w1=nrm((emb_dim, 2 * emb_dim)), b1=nrm((1, 2 * emb_dim)), s1=s1, t1=t1,
            w2=nrm((2 * emb_dim, emb_dim)), b2=nrm((1, emb_dim)),
            obn_s=obn_s, obn_t=obn_t,
        ))

    vs1, vt1 = bn_affine(2 * emb_dim)
    vs2, vt2 = bn_affine(emb_dim)
    vmlp = dict(w1=nrm((emb_dim, 2 * emb_dim)), b1=nrm((1, 2 * emb_dim)), s1=vs1, t1=vt1,
                w2=nrm((2 * emb_dim, emb_dim)), b2=nrm((1, emb_dim)), s2=vs2, t2=vt2)
    v_emb = nrm((1, emb_dim))                       # nn.Embedding(1, emb_dim)
    return dict(layers=layers, vmlp=vmlp, v_emb=v_emb)


# ----------------------------------------------------------------------------
# Driver
# ----------------------------------------------------------------------------
if __name__ == "__main__":
    num_layer = 3
    emb_dim = 32
    N, E, G = 16, 48, 2
    bond_vocab = (5, 6, 2)

    root = jax.random.PRNGKey(0)
    k_param, k_x, k_src, k_dst, k_attr = jax.random.split(root, 5)

    params = init_params(k_param, num_layer, emb_dim, bond_vocab)

    x = jax.random.normal(k_x, (N, emb_dim), jnp.float32)
    edge_index = jnp.stack([
        jax.random.randint(k_src, (E,), 0, N, jnp.int32),
        jax.random.randint(k_dst, (E,), 0, N, jnp.int32),
    ])                                                             # [2, E]
    edge_attr = jnp.stack([
        jax.random.randint(jax.random.fold_in(k_attr, k), (E,), 0, v, jnp.int32)
        for k, v in enumerate(bond_vocab)], axis=1)                # [E, 3]
    batch = jnp.repeat(jnp.arange(G, dtype=jnp.int32), N // G)     # [N], sorted

    out = encoder_forward_pallas(x, edge_index, edge_attr, batch, params, num_layer)
    out = jax.block_until_ready(out)

    ref = encoder_forward_ref(x, edge_index, edge_attr, batch, params, num_layer)
    ref = jax.block_until_ready(ref)

    assert out.shape == (N, emb_dim) and out.dtype == jnp.float32
    # tolerance accounts for the (review-requested) bf16 cast of the
    # gather/scatter one-hot matmul operands (f32 accumulation).
    np.testing.assert_allclose(np.asarray(out), np.asarray(ref), rtol=5e-2, atol=5e-2)
    print("KERNEL_OK")
</pallas_src>

<mosaic_0001>
module attributes {stable_mosaic.version = 11 : i64} {
  func.func @fused_encoder_kernel(%arg0: i32, %arg1: memref<16x128xf32, #tpu.memory_space<vmem>>, %arg2: memref<2x128xf32, #tpu.memory_space<vmem>>, %arg3: memref<48x16xbf16, #tpu.memory_space<vmem>>, %arg4: memref<16x48xbf16, #tpu.memory_space<vmem>>, %arg5: memref<16x2xf32, #tpu.memory_space<vmem>>, %arg6: memref<2x16xf32, #tpu.memory_space<vmem>>, %arg7: memref<1x1x128xf32, #tpu.memory_space<vmem>>, %arg8: memref<1x48x128xf32, #tpu.memory_space<vmem>>, %arg9: memref<1x128x128xf32, #tpu.memory_space<vmem>>, %arg10: memref<1x1x128xf32, #tpu.memory_space<vmem>>, %arg11: memref<1x1x128xf32, #tpu.memory_space<vmem>>, %arg12: memref<1x1x128xf32, #tpu.memory_space<vmem>>, %arg13: memref<1x128x128xf32, #tpu.memory_space<vmem>>, %arg14: memref<1x1x128xf32, #tpu.memory_space<vmem>>, %arg15: memref<1x1x128xf32, #tpu.memory_space<vmem>>, %arg16: memref<1x1x128xf32, #tpu.memory_space<vmem>>, %arg17: memref<128x128xf32, #tpu.memory_space<vmem>>, %arg18: memref<1x128xf32, #tpu.memory_space<vmem>>, %arg19: memref<1x128xf32, #tpu.memory_space<vmem>>, %arg20: memref<1x128xf32, #tpu.memory_space<vmem>>, %arg21: memref<128x128xf32, #tpu.memory_space<vmem>>, %arg22: memref<1x128xf32, #tpu.memory_space<vmem>>, %arg23: memref<1x128xf32, #tpu.memory_space<vmem>>, %arg24: memref<1x128xf32, #tpu.memory_space<vmem>>, %arg25: memref<16x128xf32, #tpu.memory_space<vmem>>, %arg26: memref<16x128xf32, #tpu.memory_space<vmem>>, %arg27: memref<2x128xf32, #tpu.memory_space<vmem>>) attributes {dimension_semantics = [#tpu.dimension_semantics<arbitrary>], iteration_bounds = array<i64: 3>, scalar_prefetch = 0 : i64, scratch_operands = 2 : i64, tpu.core_type = #tpu.core_type<tc>, window_params = [{pipeline_mode = #tpu.pipeline_mode<synchronous>, transform_indices = @transform_0, window_bounds = array<i64: 16, 128>}, {pipeline_mode = #tpu.pipeline_mode<synchronous>, transform_indices = @transform_1, window_bounds = array<i64: 2, 128>}, {pipeline_mode = #tpu.pipeline_mode<synchronous>, transform_indices = @transform_2, window_bounds = array<i64: 48, 16>}, {pipeline_mode = #tpu.pipeline_mode<synchronous>, transform_indices = @transform_3, window_bounds = array<i64: 16, 48>}, {pipeline_mode = #tpu.pipeline_mode<synchronous>, transform_indices = @transform_4, window_bounds = array<i64: 16, 2>}, {pipeline_mode = #tpu.pipeline_mode<synchronous>, transform_indices = @transform_5, window_bounds = array<i64: 2, 16>}, {transform_indices = @transform_6, window_bounds = array<i64: 1, 1, 128>}, {transform_indices = @transform_7, window_bounds = array<i64: 1, 48, 128>}, {transform_indices = @transform_8, window_bounds = array<i64: 1, 128, 128>}, {transform_indices = @transform_9, window_bounds = array<i64: 1, 1, 128>}, {transform_indices = @transform_10, window_bounds = array<i64: 1, 1, 128>}, {transform_indices = @transform_11, window_bounds = array<i64: 1, 1, 128>}, {transform_indices = @transform_12, window_bounds = array<i64: 1, 128, 128>}, {transform_indices = @transform_13, window_bounds = array<i64: 1, 1, 128>}, {transform_indices = @transform_14, window_bounds = array<i64: 1, 1, 128>}, {transform_indices = @transform_15, window_bounds = array<i64: 1, 1, 128>}, {pipeline_mode = #tpu.pipeline_mode<synchronous>, transform_indices = @transform_16, window_bounds = array<i64: 128, 128>}, {pipeline_mode = #tpu.pipeline_mode<synchronous>, transform_indices = @transform_17, window_bounds = array<i64: 1, 128>}, {pipeline_mode = #tpu.pipeline_mode<synchronous>, transform_indices = @transform_18, window_bounds = array<i64: 1, 128>}, {pipeline_mode = #tpu.pipeline_mode<synchronous>, transform_indices = @transform_19, window_bounds = array<i64: 1, 128>}, {pipeline_mode = #tpu.pipeline_mode<synchronous>, transform_indices = @transform_20, window_bounds = array<i64: 128, 128>}, {pipeline_mode = #tpu.pipeline_mode<synchronous>, transform_indices = @transform_21, window_bounds = array<i64: 1, 128>}, {pipeline_mode = #tpu.pipeline_mode<synchronous>, transform_indices = @transform_22, window_bounds = array<i64: 1, 128>}, {pipeline_mode = #tpu.pipeline_mode<synchronous>, transform_indices = @transform_23, window_bounds = array<i64: 1, 128>}, {pipeline_mode = #tpu.pipeline_mode<synchronous>, transform_indices = @transform_24, window_bounds = array<i64: 16, 128>}]} {
    %c0_i32 = arith.constant 0 : i32
    %0 = arith.cmpi eq, %arg0, %c0_i32 : i32
    %1 = arith.extui %0 : i1 to i32
    %c0_i32_0 = arith.constant 0 : i32
    %2 = arith.cmpi ne, %1, %c0_i32_0 : i32
    scf.if %2 {
      %c0_55 = arith.constant 0 : index
      %c0_56 = arith.constant 0 : index
      %70 = vector.load %arg1[%c0_55, %c0_56] : memref<16x128xf32, #tpu.memory_space<vmem>>, vector<16x128xf32>
      %c0_57 = arith.constant 0 : index
      %c0_58 = arith.constant 0 : index
      %71 = vector.load %arg26[%c0_57, %c0_58] : memref<16x128xf32, #tpu.memory_space<vmem>>, vector<16x128xf32>
      tpu.vector_store %arg26[%c0_57, %c0_58], %70 {strides = array<i32>} : memref<16x128xf32, #tpu.memory_space<vmem>>, vector<16x128xf32>,
      %c0_59 = arith.constant 0 : index
      %c0_60 = arith.constant 0 : index
      %72 = vector.load %arg2[%c0_59, %c0_60] : memref<2x128xf32, #tpu.memory_space<vmem>>, vector<2x128xf32>
      %c0_61 = arith.constant 0 : index
      %c0_62 = arith.constant 0 : index
      %73 = vector.load %arg27[%c0_61, %c0_62] : memref<2x128xf32, #tpu.memory_space<vmem>>, vector<2x128xf32>
      tpu.vector_store %arg27[%c0_61, %c0_62], %72 {strides = array<i32>} : memref<2x128xf32, #tpu.memory_space<vmem>>, vector<2x128xf32>,
    } else {
    }
    %c0 = arith.constant 0 : index
    %c0_1 = arith.constant 0 : index
    %3 = vector.load %arg5[%c0, %c0_1] : memref<16x2xf32, #tpu.memory_space<vmem>>, vector<16x2xf32>
    %c0_2 = arith.constant 0 : index
    %c0_3 = arith.constant 0 : index
    %4 = vector.load %arg27[%c0_2, %c0_3] : memref<2x128xf32, #tpu.memory_space<vmem>>, vector<2x128xf32>
    %cst = arith.constant dense<0.000000e+00> : vector<16x128xf32>
    %5 = tpu.matmul %3, %4, %cst {dimension_numbers = #tpu.dot_dimension_numbers<[1], [0], [0], [1], [0, 0, 1, 1], [], []>} : vector<16x2xf32>, vector<2x128xf32>, vector<16x128xf32> -> vector<16x128xf32>
    %c0_4 = arith.constant 0 : index
    %c0_5 = arith.constant 0 : index
    %6 = vector.load %arg26[%c0_4, %c0_5] : memref<16x128xf32, #tpu.memory_space<vmem>>, vector<16x128xf32>
    %c0_i32_6 = arith.constant 0 : i32
    %7 = arith.cmpi sgt, %arg0, %c0_i32_6 : i32
    %cst_7 = arith.constant 0.000000e+00 : f32
    %8 = vector.broadcast %cst_7 : f32 to vector<16x128xf32>
    %9 = arith.select %7, %5, %8 : vector<16x128xf32>
    %10 = arith.addf %6, %9 : vector<16x128xf32>
    %c0_8 = arith.constant 0 : index
    %c0_9 = arith.constant 0 : index
    %11 = vector.load %arg3[%c0_8, %c0_9] : memref<48x16xbf16, #tpu.memory_space<vmem>>, vector<48x16xbf16>
    %12 = arith.truncf %10 : vector<16x128xf32> to vector<16x128xbf16>
    %cst_10 = arith.constant dense<0.000000e+00> : vector<48x128xf32>
    %13 = tpu.matmul %11, %12, %cst_10 {dimension_numbers = #tpu.dot_dimension_numbers<[1], [0], [0], [1], [0, 0, 1, 1], [], []>} : vector<48x16xbf16>, vector<16x128xbf16>, vector<48x128xf32> -> vector<48x128xf32>
    %c0_11 = arith.constant 0 : index
    %c0_12 = arith.constant 0 : index
    %c0_13 = arith.constant 0 : index
    %14 = vector.load %arg8[%c0_11, %c0_12, %c0_13] : memref<1x48x128xf32, #tpu.memory_space<vmem>>, vector<1x48x128xf32>
    %15 = vector.shape_cast %14 : vector<1x48x128xf32> to vector<48x128xf32>
    %16 = arith.addf %13, %15 : vector<48x128xf32>
    %cst_14 = arith.constant 0.000000e+00 : f32
    %17 = vector.broadcast %cst_14 : f32 to vector<48x128xf32>
    %18 = arith.maximumf %16, %17 : vector<48x128xf32>
    %c0_15 = arith.constant 0 : index
    %c0_16 = arith.constant 0 : index
    %19 = vector.load %arg4[%c0_15, %c0_16] : memref<16x48xbf16, #tpu.memory_space<vmem>>, vector<16x48xbf16>
    %20 = arith.truncf %18 : vector<48x128xf32> to vector<48x128xbf16>
    %cst_17 = arith.constant dense<0.000000e+00> : vector<16x128xf32>
    %21 = tpu.matmul %19, %20, %cst_17 {dimension_numbers = #tpu.dot_dimension_numbers<[1], [0], [0], [1], [0, 0, 1, 1], [], []>} : vector<16x48xbf16>, vector<48x128xbf16>, vector<16x128xf32> -> vector<16x128xf32>
    %c0_18 = arith.constant 0 : index
    %c0_19 = arith.constant 0 : index
    %c0_20 = arith.constant 0 : index
    %22 = vector.load %arg7[%c0_18, %c0_19, %c0_20] : memref<1x1x128xf32, #tpu.memory_space<vmem>>, vector<1x1x128xf32>
    %23 = vector.shape_cast %22 : vector<1x1x128xf32> to vector<1x128xf32>
    %24 = vector.broadcast %23 : vector<1x128xf32> to vector<16x128xf32>
    %25 = arith.mulf %24, %10 : vector<16x128xf32>
    %26 = arith.addf %25, %21 : vector<16x128xf32>
    %c0_21 = arith.constant 0 : index
    %c0_22 = arith.constant 0 : index
    %c0_23 = arith.constant 0 : index
    %27 = vector.load %arg9[%c0_21, %c0_22, %c0_23] : memref<1x128x128xf32, #tpu.memory_space<vmem>>, vector<1x128x128xf32>
    %28 = vector.shape_cast %27 : vector<1x128x128xf32> to vector<128x128xf32>
    %cst_24 = arith.constant dense<0.000000e+00> : vector<16x128xf32>
    %29 = tpu.matmul %26, %28, %cst_24 {dimension_numbers = #tpu.dot_dimension_numbers<[1], [0], [0], [1], [0, 0, 1, 1], [], []>} : vector<16x128xf32>, vector<128x128xf32>, vector<16x128xf32> -> vector<16x128xf32>
    %c0_25 = arith.constant 0 : index
    %c0_26 = arith.constant 0 : index
    %c0_27 = arith.constant 0 : index
    %30 = vector.load %arg10[%c0_25, %c0_26, %c0_27] : memref<1x1x128xf32, #tpu.memory_space<vmem>>, vector<1x1x128xf32>
    %31 = vector.shape_cast %30 : vector<1x1x128xf32> to vector<1x128xf32>
    %32 = vector.broadcast %31 : vector<1x128xf32> to vector<16x128xf32>
    %33 = arith.addf %29, %32 : vector<16x128xf32>
    %c0_28 = arith.constant 0 : index
    %c0_29 = arith.constant 0 : index
    %c0_30 = arith.constant 0 : index
    %34 = vector.load %arg11[%c0_28, %c0_29, %c0_30] : memref<1x1x128xf32, #tpu.memory_space<vmem>>, vector<1x1x128xf32>
    %35 = vector.shape_cast %34 : vector<1x1x128xf32> to vector<1x128xf32>
    %36 = vector.broadcast %35 : vector<1x128xf32> to vector<16x128xf32>
    %37 = arith.mulf %33, %36 : vector<16x128xf32>
    %c0_31 = arith.constant 0 : index
    %c0_32 = arith.constant 0 : index
    %c0_33 = arith.constant 0 : index
    %38 = vector.load %arg12[%c0_31, %c0_32, %c0_33] : memref<1x1x128xf32, #tpu.memory_space<vmem>>, vector<1x1x128xf32>
    %39 = vector.shape_cast %38 : vector<1x1x128xf32> to vector<1x128xf32>
    %40 = vector.broadcast %39 : vector<1x128xf32> to vector<16x128xf32>
    %41 = arith.addf %37, %40 : vector<16x128xf32>
    %cst_34 = arith.constant 0.000000e+00 : f32
    %42 = vector.broadcast %cst_34 : f32 to vector<16x128xf32>
    %43 = arith.maximumf %41, %42 : vector<16x128xf32>
    %c0_35 = arith.constant 0 : index
    %c0_36 = arith.constant 0 : index
    %c0_37 = arith.constant 0 : index
    %44 = vector.load %arg13[%c0_35, %c0_36, %c0_37] : memref<1x128x128xf32, #tpu.memory_space<vmem>>, vector<1x128x128xf32>
    %45 = vector.shape_cast %44 : vector<1x128x128xf32> to vector<128x128xf32>
    %cst_38 = arith.constant dense<0.000000e+00> : vector<16x128xf32>
    %46 = tpu.matmul %43, %45, %cst_38 {dimension_numbers = #tpu.dot_dimension_numbers<[1], [0], [0], [1], [0, 0, 1, 1], [], []>} : vector<16x128xf32>, vector<128x128xf32>, vector<16x128xf32> -> vector<16x128xf32>
    %c0_39 = arith.constant 0 : index
    %c0_40 = arith.constant 0 : index
    %c0_41 = arith.constant 0 : index
    %47 = vector.load %arg14[%c0_39, %c0_40, %c0_41] : memref<1x1x128xf32, #tpu.memory_space<vmem>>, vector<1x1x128xf32>
    %48 = vector.shape_cast %47 : vector<1x1x128xf32> to vector<1x128xf32>
    %49 = vector.broadcast %48 : vector<1x128xf32> to vector<16x128xf32>
    %50 = arith.addf %46, %49 : vector<16x128xf32>
    %c0_42 = arith.constant 0 : index
    %c0_43 = arith.constant 0 : index
    %c0_44 = arith.constant 0 : index
    %51 = vector.load %arg15[%c0_42, %c0_43, %c0_44] : memref<1x1x128xf32, #tpu.memory_space<vmem>>, vector<1x1x128xf32>
    %52 = vector.shape_cast %51 : vector<1x1x128xf32> to vector<1x128xf32>
    %53 = vector.broadcast %52 : vector<1x128xf32> to vector<16x128xf32>
    %54 = arith.mulf %50, %53 : vector<16x128xf32>
    %c0_45 = arith.constant 0 : index
    %c0_46 = arith.constant 0 : index
    %c0_47 = arith.constant 0 : index
    %55 = vector.load %arg16[%c0_45, %c0_46, %c0_47] : memref<1x1x128xf32, #tpu.memory_space<vmem>>, vector<1x1x128xf32>
    %56 = vector.shape_cast %55 : vector<1x1x128xf32> to vector<1x128xf32>
    %57 = vector.broadcast %56 : vector<1x128xf32> to vector<16x128xf32>
    %58 = arith.addf %54, %57 : vector<16x128xf32>
    %c2_i32 = arith.constant 2 : i32
    %59 = arith.cmpi slt, %arg0, %c2_i32 : i32
    %cst_48 = arith.constant 0.000000e+00 : f32
    %60 = vector.broadcast %cst_48 : f32 to vector<16x128xf32>
    %61 = arith.maximumf %58, %60 : vector<16x128xf32>
    %62 = arith.select %59, %61, %58 : vector<16x128xf32>
    %c0_49 = arith.constant 0 : index
    %c0_50 = arith.constant 0 : index
    %63 = vector.load %arg26[%c0_49, %c0_50] : memref<16x128xf32, #tpu.memory_space<vmem>>, vector<16x128xf32>
    tpu.vector_store %arg26[%c0_49, %c0_50], %62 {strides = array<i32>} : memref<16x128xf32, #tpu.memory_space<vmem>>, vector<16x128xf32>,
    %c0_51 = arith.constant 0 : index
    %c0_52 = arith.constant 0 : index
    %64 = vector.load %arg25[%c0_51, %c0_52] : memref<16x128xf32, #tpu.memory_space<vmem>>, vector<16x128xf32>
    tpu.vector_store %arg25[%c0_51, %c0_52], %62 {strides = array<i32>} : memref<16x128xf32, #tpu.memory_space<vmem>>, vector<16x128xf32>,
    %c1_i32 = arith.constant 1 : i32
    %65 = arith.cmpi sge, %arg0, %c1_i32 : i32
    %c2_i32_53 = arith.constant 2 : i32
    %66 = arith.cmpi slt, %arg0, %c2_i32_53 : i32
    %67 = arith.andi %65, %66 : i1
    %68 = arith.extui %67 : i1 to i32
    %c0_i32_54 = arith.constant 0 : i32
    %69 = arith.cmpi ne, %68, %c0_i32_54 : i32
    scf.if %69 {
      %c0_55 = arith.constant 0 : index
      %c0_56 = arith.constant 0 : index
      %70 = vector.load %arg6[%c0_55, %c0_56] : memref<2x16xf32, #tpu.memory_space<vmem>>, vector<2x16xf32>
      %cst_57 = arith.constant dense<0.000000e+00> : vector<2x128xf32>
      %71 = tpu.matmul %70, %62, %cst_57 {dimension_numbers = #tpu.dot_dimension_numbers<[1], [0], [0], [1], [0, 0, 1, 1], [], []>} : vector<2x16xf32>, vector<16x128xf32>, vector<2x128xf32> -> vector<2x128xf32>
      %c0_58 = arith.constant 0 : index
      %c0_59 = arith.constant 0 : index
      %72 = vector.load %arg27[%c0_58, %c0_59] : memref<2x128xf32, #tpu.memory_space<vmem>>, vector<2x128xf32>
      %73 = arith.addf %71, %72 : vector<2x128xf32>
      %c0_60 = arith.constant 0 : index
      %c0_61 = arith.constant 0 : index
      %74 = vector.load %arg17[%c0_60, %c0_61] : memref<128x128xf32, #tpu.memory_space<vmem>>, vector<128x128xf32>
      %cst_62 = arith.constant dense<0.000000e+00> : vector<2x128xf32>
      %75 = tpu.matmul %73, %74, %cst_62 {dimension_numbers = #tpu.dot_dimension_numbers<[1], [0], [0], [1], [0, 0, 1, 1], [], []>} : vector<2x128xf32>, vector<128x128xf32>, vector<2x128xf32> -> vector<2x128xf32>
      %c0_63 = arith.constant 0 : index
      %c0_64 = arith.constant 0 : index
      %76 = vector.load %arg18[%c0_63, %c0_64] : memref<1x128xf32, #tpu.memory_space<vmem>>, vector<1x128xf32>
      %77 = vector.broadcast %76 : vector<1x128xf32> to vector<2x128xf32>
      %78 = arith.addf %75, %77 : vector<2x128xf32>
      %c0_65 = arith.constant 0 : index
      %c0_66 = arith.constant 0 : index
      %79 = vector.load %arg19[%c0_65, %c0_66] : memref<1x128xf32, #tpu.memory_space<vmem>>, vector<1x128xf32>
      %80 = vector.broadcast %79 : vector<1x128xf32> to vector<2x128xf32>
      %81 = arith.mulf %78, %80 : vector<2x128xf32>
      %c0_67 = arith.constant 0 : index
      %c0_68 = arith.constant 0 : index
      %82 = vector.load %arg20[%c0_67, %c0_68] : memref<1x128xf32, #tpu.memory_space<vmem>>, vector<1x128xf32>
      %83 = vector.broadcast %82 : vector<1x128xf32> to vector<2x128xf32>
      %84 = arith.addf %81, %83 : vector<2x128xf32>
      %cst_69 = arith.constant 0.000000e+00 : f32
      %85 = vector.broadcast %cst_69 : f32 to vector<2x128xf32>
      %86 = arith.maximumf %84, %85 : vector<2x128xf32>
      %c0_70 = arith.constant 0 : index
      %c0_71 = arith.constant 0 : index
      %87 = vector.load %arg21[%c0_70, %c0_71] : memref<128x128xf32, #tpu.memory_space<vmem>>, vector<128x128xf32>
      %cst_72 = arith.constant dense<0.000000e+00> : vector<2x128xf32>
      %88 = tpu.matmul %86, %87, %cst_72 {dimension_numbers = #tpu.dot_dimension_numbers<[1], [0], [0], [1], [0, 0, 1, 1], [], []>} : vector<2x128xf32>, vector<128x128xf32>, vector<2x128xf32> -> vector<2x128xf32>
      %c0_73 = arith.constant 0 : index
      %c0_74 = arith.constant 0 : index
      %89 = vector.load %arg22[%c0_73, %c0_74] : memref<1x128xf32, #tpu.memory_space<vmem>>, vector<1x128xf32>
      %90 = vector.broadcast %89 : vector<1x128xf32> to vector<2x128xf32>
      %91 = arith.addf %88, %90 : vector<2x128xf32>
      %c0_75 = arith.constant 0 : index
      %c0_76 = arith.constant 0 : index
      %92 = vector.load %arg23[%c0_75, %c0_76] : memref<1x128xf32, #tpu.memory_space<vmem>>, vector<1x128xf32>
      %93 = vector.broadcast %92 : vector<1x128xf32> to vector<2x128xf32>
      %94 = arith.mulf %91, %93 : vector<2x128xf32>
      %c0_77 = arith.constant 0 : index
      %c0_78 = arith.constant 0 : index
      %95 = vector.load %arg24[%c0_77, %c0_78] : memref<1x128xf32, #tpu.memory_space<vmem>>, vector<1x128xf32>
      %96 = vector.broadcast %95 : vector<1x128xf32> to vector<2x128xf32>
      %97 = arith.addf %94, %96 : vector<2x128xf32>
      %cst_79 = arith.constant 0.000000e+00 : f32
      %98 = vector.broadcast %cst_79 : f32 to vector<2x128xf32>
      %99 = arith.maximumf %97, %98 : vector<2x128xf32>
      %c0_80 = arith.constant 0 : index
      %c0_81 = arith.constant 0 : index
      %100 = vector.load %arg27[%c0_80, %c0_81] : memref<2x128xf32, #tpu.memory_space<vmem>>, vector<2x128xf32>
      tpu.vector_store %arg27[%c0_80, %c0_81], %99 {strides = array<i32>} : memref<2x128xf32, #tpu.memory_space<vmem>>, vector<2x128xf32>,
    } else {
    }
    return
  }
  func.func @transform_0(%arg0: i32) -> (i32, i32) {
    %c0_i32 = arith.constant 0 : i32
    %c0_i32_0 = arith.constant 0 : i32
    %c0_i32_1 = arith.constant 0 : i32
    return %c0_i32, %c0_i32_0 : i32, i32
  }
  func.func @transform_1(%arg0: i32) -> (i32, i32) {
    %c0_i32 = arith.constant 0 : i32
    %c0_i32_0 = arith.constant 0 : i32
    %c0_i32_1 = arith.constant 0 : i32
    return %c0_i32, %c0_i32_0 : i32, i32
  }
  func.func @transform_2(%arg0: i32) -> (i32, i32) {
    %c0_i32 = arith.constant 0 : i32
    %c0_i32_0 = arith.constant 0 : i32
    %c0_i32_1 = arith.constant 0 : i32
    return %c0_i32, %c0_i32_0 : i32, i32
  }
  func.func @transform_3(%arg0: i32) -> (i32, i32) {
    %c0_i32 = arith.constant 0 : i32
    %c0_i32_0 = arith.constant 0 : i32
    %c0_i32_1 = arith.constant 0 : i32
    return %c0_i32, %c0_i32_0 : i32, i32
  }
  func.func @transform_4(%arg0: i32) -> (i32, i32) {
    %c0_i32 = arith.constant 0 : i32
    %c0_i32_0 = arith.constant 0 : i32
    %c0_i32_1 = arith.constant 0 : i32
    return %c0_i32, %c0_i32_0 : i32, i32
  }
  func.func @transform_5(%arg0: i32) -> (i32, i32) {
    %c0_i32 = arith.constant 0 : i32
    %c0_i32_0 = arith.constant 0 : i32
    %c0_i32_1 = arith.constant 0 : i32
    return %c0_i32, %c0_i32_0 : i32, i32
  }
  func.func @transform_6(%arg0: i32) -> (i32, i32, i32) {
    %c0_i32 = arith.constant 0 : i32
    %c0_i32_0 = arith.constant 0 : i32
    %c0_i32_1 = arith.constant 0 : i32
    return %arg0, %c0_i32, %c0_i32_0 : i32, i32, i32
  }
  func.func @transform_7(%arg0: i32) -> (i32, i32, i32) {
    %c0_i32 = arith.constant 0 : i32
    %c0_i32_0 = arith.constant 0 : i32
    %c0_i32_1 = arith.constant 0 : i32
    return %arg0, %c0_i32, %c0_i32_0 : i32, i32, i32
  }
  func.func @transform_8(%arg0: i32) -> (i32, i32, i32) {
    %c0_i32 = arith.constant 0 : i32
    %c0_i32_0 = arith.constant 0 : i32
    %c0_i32_1 = arith.constant 0 : i32
    return %arg0, %c0_i32, %c0_i32_0 : i32, i32, i32
  }
  func.func @transform_9(%arg0: i32) -> (i32, i32, i32) {
    %c0_i32 = arith.constant 0 : i32
    %c0_i32_0 = arith.constant 0 : i32
    %c0_i32_1 = arith.constant 0 : i32
    return %arg0, %c0_i32, %c0_i32_0 : i32, i32, i32
  }
  func.func @transform_10(%arg0: i32) -> (i32, i32, i32) {
    %c0_i32 = arith.constant 0 : i32
    %c0_i32_0 = arith.constant 0 : i32
    %c0_i32_1 = arith.constant 0 : i32
    return %arg0, %c0_i32, %c0_i32_0 : i32, i32, i32
  }
  func.func @transform_11(%arg0: i32) -> (i32, i32, i32) {
    %c0_i32 = arith.constant 0 : i32
    %c0_i32_0 = arith.constant 0 : i32
    %c0_i32_1 = arith.constant 0 : i32
    return %arg0, %c0_i32, %c0_i32_0 : i32, i32, i32
  }
  func.func @transform_12(%arg0: i32) -> (i32, i32, i32) {
    %c0_i32 = arith.constant 0 : i32
    %c0_i32_0 = arith.constant 0 : i32
    %c0_i32_1 = arith.constant 0 : i32
    return %arg0, %c0_i32, %c0_i32_0 : i32, i32, i32
  }
  func.func @transform_13(%arg0: i32) -> (i32, i32, i32) {
    %c0_i32 = arith.constant 0 : i32
    %c0_i32_0 = arith.constant 0 : i32
    %c0_i32_1 = arith.constant 0 : i32
    return %arg0, %c0_i32, %c0_i32_0 : i32, i32, i32
  }
  func.func @transform_14(%arg0: i32) -> (i32, i32, i32) {
    %c0_i32 = arith.constant 0 : i32
    %c0_i32_0 = arith.constant 0 : i32
    %c0_i32_1 = arith.constant 0 : i32
    return %arg0, %c0_i32, %c0_i32_0 : i32, i32, i32
  }
  func.func @transform_15(%arg0: i32) -> (i32, i32, i32) {
    %c0_i32 = arith.constant 0 : i32
    %c0_i32_0 = arith.constant 0 : i32
    %c0_i32_1 = arith.constant 0 : i32
    return %arg0, %c0_i32, %c0_i32_0 : i32, i32, i32
  }
  func.func @transform_16(%arg0: i32) -> (i32, i32) {
    %c0_i32 = arith.constant 0 : i32
    %c0_i32_0 = arith.constant 0 : i32
    %c0_i32_1 = arith.constant 0 : i32
    return %c0_i32, %c0_i32_0 : i32, i32
  }
  func.func @transform_17(%arg0: i32) -> (i32, i32) {
    %c0_i32 = arith.constant 0 : i32
    %c0_i32_0 = arith.constant 0 : i32
    %c0_i32_1 = arith.constant 0 : i32
    return %c0_i32, %c0_i32_0 : i32, i32
  }
  func.func @transform_18(%arg0: i32) -> (i32, i32) {
    %c0_i32 = arith.constant 0 : i32
    %c0_i32_0 = arith.constant 0 : i32
    %c0_i32_1 = arith.constant 0 : i32
    return %c0_i32, %c0_i32_0 : i32, i32
  }
  func.func @transform_19(%arg0: i32) -> (i32, i32) {
    %c0_i32 = arith.constant 0 : i32
    %c0_i32_0 = arith.constant 0 : i32
    %c0_i32_1 = arith.constant 0 : i32
    return %c0_i32, %c0_i32_0 : i32, i32
  }
  func.func @transform_20(%arg0: i32) -> (i32, i32) {
    %c0_i32 = arith.constant 0 : i32
    %c0_i32_0 = arith.constant 0 : i32
    %c0_i32_1 = arith.constant 0 : i32
    return %c0_i32, %c0_i32_0 : i32, i32
  }
  func.func @transform_21(%arg0: i32) -> (i32, i32) {
    %c0_i32 = arith.constant 0 : i32
    %c0_i32_0 = arith.constant 0 : i32
    %c0_i32_1 = arith.constant 0 : i32
    return %c0_i32, %c0_i32_0 : i32, i32
  }
  func.func @transform_22(%arg0: i32) -> (i32, i32) {
    %c0_i32 = arith.constant 0 : i32
    %c0_i32_0 = arith.constant 0 : i32
    %c0_i32_1 = arith.constant 0 : i32
    return %c0_i32, %c0_i32_0 : i32, i32
  }
  func.func @transform_23(%arg0: i32) -> (i32, i32) {
    %c0_i32 = arith.constant 0 : i32
    %c0_i32_0 = arith.constant 0 : i32
    %c0_i32_1 = arith.constant 0 : i32
    return %c0_i32, %c0_i32_0 : i32, i32
  }
  func.func @transform_24(%arg0: i32) -> (i32, i32) {
    %c0_i32 = arith.constant 0 : i32
    %c0_i32_0 = arith.constant 0 : i32
    %c0_i32_1 = arith.constant 0 : i32
    return %c0_i32, %c0_i32_0 : i32, i32
  }
}

</mosaic_0001>

<llo_original>
// kernel: tpu_custom_call.1
$region0: #{tpu_custom_call.1}
  #allocation0 [shape = 'u32[]', space=smem, size = 0x4, offset = 0x4, fixed_abs, tag = 'smem constant byte address 0x4 - core index']
  #allocation1 [shape = 'u32[144,128]{1,0:T(1,128)}', space=vmem, size = 0x12000, scoped, tag = 'internal scratch']
  #allocation2 [shape = 'f32[16,128]{1,0:T(8,128)}', space=vmem, size = 0x2000, scoped, tag = 'scratch operand']
  #allocation3 [shape = 'f32[2,128]{1,0:T(2,128)}', space=vmem, size = 0x400, scoped, tag = 'scratch operand']
  %s0 = inlined_call_operand.vmem [shape: f32[16,128], index: 0, kind: input, shape index: {}]
  %s1 = inlined_call_operand.hbm [shape: f32[2,128], index: 1, kind: input, shape index: {}]
  %s2 = inlined_call_operand.vmem [shape: bf16[48,16], index: 2, kind: input, shape index: {}]
  %s3 = inlined_call_operand.vmem [shape: bf16[16,48], index: 3, kind: input, shape index: {}]
  %s4 = inlined_call_operand.vmem [shape: f32[16,2], index: 4, kind: input, shape index: {}]
  %s5 = inlined_call_operand.vmem [shape: f32[2,16], index: 5, kind: input, shape index: {}]
  %s6 = inlined_call_operand.vmem [shape: f32[3,1,128], index: 6, kind: input, shape index: {}]
  %s7 = inlined_call_operand.hbm [shape: f32[3,48,128], index: 7, kind: input, shape index: {}]
  %s8 = inlined_call_operand.hbm [shape: f32[3,128,128], index: 8, kind: input, shape index: {}]
  %s9 = inlined_call_operand.vmem [shape: f32[3,1,128], index: 9, kind: input, shape index: {}]
  %s10 = inlined_call_operand.vmem [shape: f32[3,1,128], index: 10, kind: input, shape index: {}]
  %s11 = inlined_call_operand.vmem [shape: f32[3,1,128], index: 11, kind: input, shape index: {}]
  %s12 = inlined_call_operand.hbm [shape: f32[3,128,128], index: 12, kind: input, shape index: {}]
  %s13 = inlined_call_operand.vmem [shape: f32[3,1,128], index: 13, kind: input, shape index: {}]
  %s14 = inlined_call_operand.vmem [shape: f32[3,1,128], index: 14, kind: input, shape index: {}]
  %s15 = inlined_call_operand.vmem [shape: f32[3,1,128], index: 15, kind: input, shape index: {}]
  %s16 = inlined_call_operand.hbm [shape: f32[128,128], index: 16, kind: input, shape index: {}]
  %s17 = inlined_call_operand.vmem [shape: f32[1,128], index: 17, kind: input, shape index: {}]
  %s18 = inlined_call_operand.vmem [shape: f32[1,128], index: 18, kind: input, shape index: {}]
  %s19 = inlined_call_operand.vmem [shape: f32[1,128], index: 19, kind: input, shape index: {}]
  %s20 = inlined_call_operand.hbm [shape: f32[128,128], index: 20, kind: input, shape index: {}]
  %s21 = inlined_call_operand.vmem [shape: f32[1,128], index: 21, kind: input, shape index: {}]
  %s22 = inlined_call_operand.vmem [shape: f32[1,128], index: 22, kind: input, shape index: {}]
  %s23 = inlined_call_operand.vmem [shape: f32[1,128], index: 23, kind: input, shape index: {}]
  %s24 = inlined_call_operand.hbm [shape: f32[16,128], index: 24, kind: output, shape index: {}]
  %s25 = sld [smem:[#allocation0]]
  $region161: #{tpu_custom_call.1} parent=0
    _
  %s27 = ssub.s32 1, %s25
  %s28 = scalar_select 0, %s27, %s25
  $region1: #{tpu_custom_call.1} parent=0
    #allocation4 [shape = 'u8[1024]{0}', space=vmem, size = 0x400, scoped, tag = 'input window, operand 1, single buffered']
    #allocation5 [shape = 's32[2]{0}', space=sflag, size = 0x8, scoped, tag = 'scoped memory for tpu_custom_call.1']
    #allocation6 [shape = 's32[2]{0}', space=sflag, size = 0x8, scoped, tag = 'scoped memory for tpu_custom_call.1']
    #allocation7 [shape = 'u8[49152]{0}', space=vmem, size = 0xc000, scoped, tag = 'input window, operand 7']
    #allocation8 [shape = 's32[2]{0}', space=sflag, size = 0x8, scoped, tag = 'scoped memory for tpu_custom_call.1']
    #allocation9 [shape = 'u8[131072]{0}', space=vmem, size = 0x20000, scoped, tag = 'input window, operand 8']
    #allocation10 [shape = 'u8[131072]{0}', space=vmem, size = 0x20000, scoped, tag = 'input window, operand 12']
    #allocation11 [shape = 's32[2]{0}', space=sflag, size = 0x8, scoped, tag = 'scoped memory for tpu_custom_call.1']
    #allocation12 [shape = 'u8[65536]{0}', space=vmem, size = 0x10000, scoped, tag = 'input window, operand 16, single buffered']
    #allocation13 [shape = 'u8[65536]{0}', space=vmem, size = 0x10000, scoped, tag = 'input window, operand 20, single buffered']
    #allocation14 [shape = 's32[1]{0}', space=sflag, size = 0x4, scoped, tag = 'scoped memory for tpu_custom_call.1']
    #allocation15 [shape = 'u8[8192]{0}', space=vmem, size = 0x2000, scoped, tag = 'output window, operand 0, single buffered']
    %29 = vsyncpa [#allocation5], 0
    %30 = vsyncpa [#allocation8], 0
    %s31 = scalar_lea.sflag [#allocation8], 1
    %32 = vsyncpa %s31, 0
    %33 = vsyncpa [#allocation11], 0
    %s34 = scalar_lea.sflag [#allocation11], 1
    %35 = vsyncpa %s34, 0
    %36 = vsyncpa [#allocation14], 0
    %37 = vsyncpa [#allocation6], 0
    loop: start=0, step=1, limit=5
    $region2: #{tpu_custom_call.1} parent=1 // loop_pre_header
      _
    $region3: #{tpu_custom_call.1} parent=1 // loop_header
      %s39 = sphi 0, %s43
      %p40 = scmp.ge.s32.totalorder %s39, 5
      %s47 = sphi 0, %s47
      %s49 = sphi 0, %s47
      %s50 = sphi 0, %s49
      %s64 = sphi 0, %s50
      %s68 = sphi 0, %s68
      %s70 = sphi 0, %s68
      %s71 = sphi 0, %s70
      %s85 = sphi 0, %s71
      %s89 = sphi 0, %s89
      %s91 = sphi 0, %s89
      %s92 = sphi 0, %s91
      %s106 = sphi 0, %s92
      %s110 = sphi 0, %s110
      %s112 = sphi 0, %s110
      %s113 = sphi 0, %s112
      %s127 = sphi 0, %s113
      %s131 = sphi 0, %s131
      %s133 = sphi 0, %s131
      %s134 = sphi 0, %s133
      %s148 = sphi 0, %s134
      %s152 = sphi 0, %s152
      %s154 = sphi 0, %s152
      %s155 = sphi 0, %s154
      %s169 = sphi 0, %s155
      %s175 = sphi 0, %s177
      %s178 = sphi 0, %s175
      %s179 = sphi 0, %s178
      %s195 = sphi 0, %s179
      %s201 = sphi 0, %s203
      %s204 = sphi 0, %s201
      %s205 = sphi 0, %s204
      %s221 = sphi 0, %s205
      %s227 = sphi 0, %s229
      %s230 = sphi 0, %s227
      %s231 = sphi 0, %s230
      %s247 = sphi 0, %s231
      %s253 = sphi 0, %s255
      %s256 = sphi 0, %s253
      %s257 = sphi 0, %s256
      %s273 = sphi 0, %s257
      %s279 = sphi 0, %s281
      %s282 = sphi 0, %s279
      %s283 = sphi 0, %s282
      %s299 = sphi 0, %s283
      %s305 = sphi 0, %s307
      %s308 = sphi 0, %s305
      %s309 = sphi 0, %s308
      %s325 = sphi 0, %s309
      %s331 = sphi 0, %s333
      %s334 = sphi 0, %s331
      %s335 = sphi 0, %s334
      %s351 = sphi 0, %s335
      %s357 = sphi 0, %s359
      %s360 = sphi 0, %s357
      %s361 = sphi 0, %s360
      %s377 = sphi 0, %s361
      %s383 = sphi 0, %s385
      %s386 = sphi 0, %s383
      %s387 = sphi 0, %s386
      %s403 = sphi 0, %s387
      %s409 = sphi 0, %s411
      %s412 = sphi 0, %s409
      %s413 = sphi 0, %s412
      %s429 = sphi 0, %s413
      %s433 = sphi 0, %s433
      %s435 = sphi 0, %s433
      %s436 = sphi 0, %s435
      %s450 = sphi 0, %s436
      %s454 = sphi 0, %s454
      %s456 = sphi 0, %s454
      %s457 = sphi 0, %s456
      %s471 = sphi 0, %s457
      %s475 = sphi 0, %s475
      %s477 = sphi 0, %s475
      %s478 = sphi 0, %s477
      %s492 = sphi 0, %s478
      %s496 = sphi 0, %s496
      %s498 = sphi 0, %s496
      %s499 = sphi 0, %s498
      %s513 = sphi 0, %s499
      %s517 = sphi 0, %s517
      %s519 = sphi 0, %s517
      %s520 = sphi 0, %s519
      %s534 = sphi 0, %s520
      %s538 = sphi 0, %s538
      %s540 = sphi 0, %s538
      %s541 = sphi 0, %s540
      %s555 = sphi 0, %s541
      %s559 = sphi 0, %s559
      %s561 = sphi 0, %s559
      %s562 = sphi 0, %s561
      %s576 = sphi 0, %s562
      %s580 = sphi 0, %s580
      %s582 = sphi 0, %s580
      %s583 = sphi 0, %s582
      %s597 = sphi 0, %s583
      %s601 = sphi 0, %s601
      %s603 = sphi 0, %s601
      %s604 = sphi 0, %s603
      %s618 = sphi 0, %s604
    $region4: #{tpu_custom_call.1} parent=1 // loop_header_branch
      %42 = sbr.rel (%p40) target = $region8
    $region5: #{tpu_custom_call.1} parent=1 // loop_body
      %s44 = ssub.s32 %s39, 1
      %s45 = ssub.s32 %s39, 2
      %s46 = sadd.s32 %s39, 1
      %s48 = sadd.s32 %s47, 1
      %p51 = scmp.eq.s32.totalorder %s39, 2
      %p52 = scmp.ne.s32.totalorder %s47, %s49
      %p53 = scmp.eq.s32.totalorder %s39, 0
      %p54 = por %p52, %p53
      %p55 = scmp.ne.s32.totalorder %s47, %s49
      %p56 = scmp.eq.s32.totalorder %s44, 2
      %p57 = por %p55, %p56
      %p58 = scmp.ne.s32.totalorder %s49, %s50
      %p59 = scmp.eq.s32.totalorder %s44, 0
      %p60 = por %p58, %p59
      %p61 = scmp.ne.s32.totalorder %s49, %s50
      %p62 = scmp.eq.s32.totalorder %s45, 2
      %p63 = por %p61, %p62
      %p65 = scmp.ne.s32.totalorder %s50, %s64
      %p66 = scmp.eq.s32.totalorder %s45, 0
      %p67 = por %p65, %p66
      %s69 = sadd.s32 %s68, 1
      %p72 = scmp.eq.s32.totalorder %s39, 2
      %p73 = scmp.ne.s32.totalorder %s68, %s70
      %p74 = scmp.eq.s32.totalorder %s39, 0
      %p75 = por %p73, %p74
      %p76 = scmp.ne.s32.totalorder %s68, %s70
      %p77 = scmp.eq.s32.totalorder %s44, 2
      %p78 = por %p76, %p77
      %p79 = scmp.ne.s32.totalorder %s70, %s71
      %p80 = scmp.eq.s32.totalorder %s44, 0
      %p81 = por %p79, %p80
      %p82 = scmp.ne.s32.totalorder %s70, %s71
      %p83 = scmp.eq.s32.totalorder %s45, 2
      %p84 = por %p82, %p83
      %p86 = scmp.ne.s32.totalorder %s71, %s85
      %p87 = scmp.eq.s32.totalorder %s45, 0
      %p88 = por %p86, %p87
      %s90 = sadd.s32 %s89, 1
      %p93 = scmp.eq.s32.totalorder %s39, 2
      %p94 = scmp.ne.s32.totalorder %s89, %s91
      %p95 = scmp.eq.s32.totalorder %s39, 0
      %p96 = por %p94, %p95
      %p97 = scmp.ne.s32.totalorder %s89, %s91
      %p98 = scmp.eq.s32.totalorder %s44, 2
      %p99 = por %p97, %p98
      %p100 = scmp.ne.s32.totalorder %s91, %s92
      %p101 = scmp.eq.s32.totalorder %s44, 0
      %p102 = por %p100, %p101
      %p103 = scmp.ne.s32.totalorder %s91, %s92
      %p104 = scmp.eq.s32.totalorder %s45, 2
      %p105 = por %p103, %p104
      %p107 = scmp.ne.s32.totalorder %s92, %s106
      %p108 = scmp.eq.s32.totalorder %s45, 0
      %p109 = por %p107, %p108
      %s111 = sadd.s32 %s110, 1
      %p114 = scmp.eq.s32.totalorder %s39, 2
      %p115 = scmp.ne.s32.totalorder %s110, %s112
      %p116 = scmp.eq.s32.totalorder %s39, 0
      %p117 = por %p115, %p116
      %p118 = scmp.ne.s32.totalorder %s110, %s112
      %p119 = scmp.eq.s32.totalorder %s44, 2
      %p120 = por %p118, %p119
      %p121 = scmp.ne.s32.totalorder %s112, %s113
      %p122 = scmp.eq.s32.totalorder %s44, 0
      %p123 = por %p121, %p122
      %p124 = scmp.ne.s32.totalorder %s112, %s113
      %p125 = scmp.eq.s32.totalorder %s45, 2
      %p126 = por %p124, %p125
      %p128 = scmp.ne.s32.totalorder %s113, %s127
      %p129 = scmp.eq.s32.totalorder %s45, 0
      %p130 = por %p128, %p129
      %s132 = sadd.s32 %s131, 1
      %p135 = scmp.eq.s32.totalorder %s39, 2
      %p136 = scmp.ne.s32.totalorder %s131, %s133
      %p137 = scmp.eq.s32.totalorder %s39, 0
      %p138 = por %p136, %p137
      %p139 = scmp.ne.s32.totalorder %s131, %s133
      %p140 = scmp.eq.s32.totalorder %s44, 2
      %p141 = por %p139, %p140
      %p142 = scmp.ne.s32.totalorder %s133, %s134
      %p143 = scmp.eq.s32.totalorder %s44, 0
      %p144 = por %p142, %p143
      %p145 = scmp.ne.s32.totalorder %s133, %s134
      %p146 = scmp.eq.s32.totalorder %s45, 2
      %p147 = por %p145, %p146
      %p149 = scmp.ne.s32.totalorder %s134, %s148
      %p150 = scmp.eq.s32.totalorder %s45, 0
      %p151 = por %p149, %p150
      %s153 = sadd.s32 %s152, 1
      %p156 = scmp.eq.s32.totalorder %s39, 2
      %p157 = scmp.ne.s32.totalorder %s152, %s154
      %p158 = scmp.eq.s32.totalorder %s39, 0
      %p159 = por %p157, %p158
      %p160 = scmp.ne.s32.totalorder %s152, %s154
      %p161 = scmp.eq.s32.totalorder %s44, 2
      %p162 = por %p160, %p161
      %p163 = scmp.ne.s32.totalorder %s154, %s155
      %p164 = scmp.eq.s32.totalorder %s44, 0
      %p165 = por %p163, %p164
      %p166 = scmp.ne.s32.totalorder %s154, %s155
      %p167 = scmp.eq.s32.totalorder %s45, 2
      %p168 = por %p166, %p167
      %p170 = scmp.ne.s32.totalorder %s155, %s169
      %p171 = scmp.eq.s32.totalorder %s45, 0
      %p172 = por %p170, %p171
      %s173 = ssub.s32 %s39, %s46
      %p174 = scmp.eq.s32.totalorder %s173, 0
      %s176 = sadd.s32 %s175, 1
      %s177 = scalar_select %p174, %s175, %s176
      %p180 = pneg %p174
      %p181 = scmp.eq.s32.totalorder %s39, 2
      %p182 = por %p180, %p181
      %p183 = scmp.ne.s32.totalorder %s175, %s178
      %p184 = scmp.eq.s32.totalorder %s39, 0
      %p185 = por %p183, %p184
      %p186 = scmp.ne.s32.totalorder %s175, %s178
      %p187 = scmp.eq.s32.totalorder %s44, 2
      %p188 = por %p186, %p187
      %p189 = scmp.ne.s32.totalorder %s178, %s179
      %p190 = scmp.eq.s32.totalorder %s44, 0
      %p191 = por %p189, %p190
      %p192 = scmp.ne.s32.totalorder %s178, %s179
      %p193 = scmp.eq.s32.totalorder %s45, 2
      %p194 = por %p192, %p193
      %p196 = scmp.ne.s32.totalorder %s179, %s195
      %p197 = scmp.eq.s32.totalorder %s45, 0
      %p198 = por %p196, %p197
      %s199 = ssub.s32 %s39, %s46
      %p200 = scmp.eq.s32.totalorder %s199, 0
      %s202 = sadd.s32 %s201, 1
      %s203 = scalar_select %p200, %s201, %s202
      %p206 = pneg %p200
      %p207 = scmp.eq.s32.totalorder %s39, 2
      %p208 = por %p206, %p207
      %p209 = scmp.ne.s32.totalorder %s201, %s204
      %p210 = scmp.eq.s32.totalorder %s39, 0
      %p211 = por %p209, %p210
      %p212 = scmp.ne.s32.totalorder %s201, %s204
      %p213 = scmp.eq.s32.totalorder %s44, 2
      %p214 = por %p212, %p213
      %p215 = scmp.ne.s32.totalorder %s204, %s205
      %p216 = scmp.eq.s32.totalorder %s44, 0
      %p217 = por %p215, %p216
      %p218 = scmp.ne.s32.totalorder %s204, %s205
      %p219 = scmp.eq.s32.totalorder %s45, 2
      %p220 = por %p218, %p219
      %p222 = scmp.ne.s32.totalorder %s205, %s221
      %p223 = scmp.eq.s32.totalorder %s45, 0
      %p224 = por %p222, %p223
      %s225 = ssub.s32 %s39, %s46
      %p226 = scmp.eq.s32.totalorder %s225, 0
      %s228 = sadd.s32 %s227, 1
      %s229 = scalar_select %p226, %s227, %s228
      %p232 = pneg %p226
      %p233 = scmp.eq.s32.totalorder %s39, 2
      %p234 = por %p232, %p233
      %p235 = scmp.ne.s32.totalorder %s227, %s230
      %p236 = scmp.eq.s32.totalorder %s39, 0
      %p237 = por %p235, %p236
      %p238 = scmp.ne.s32.totalorder %s227, %s230
      %p239 = scmp.eq.s32.totalorder %s44, 2
      %p240 = por %p238, %p239
      %p241 = scmp.ne.s32.totalorder %s230, %s231
      %p242 = scmp.eq.s32.totalorder %s44, 0
      %p243 = por %p241, %p242
      %p244 = scmp.ne.s32.totalorder %s230, %s231
      %p245 = scmp.eq.s32.totalorder %s45, 2
      %p246 = por %p244, %p245
      %p248 = scmp.ne.s32.totalorder %s231, %s247
      %p249 = scmp.eq.s32.totalorder %s45, 0
      %p250 = por %p248, %p249
      %s251 = ssub.s32 %s39, %s46
      %p252 = scmp.eq.s32.totalorder %s251, 0
      %s254 = sadd.s32 %s253, 1
      %s255 = scalar_select %p252, %s253, %s254
      %p258 = pneg %p252
      %p259 = scmp.eq.s32.totalorder %s39, 2
      %p260 = por %p258, %p259
      %p261 = scmp.ne.s32.totalorder %s253, %s256
      %p262 = scmp.eq.s32.totalorder %s39, 0
      %p263 = por %p261, %p262
      %p264 = scmp.ne.s32.totalorder %s253, %s256
      %p265 = scmp.eq.s32.totalorder %s44, 2
      %p266 = por %p264, %p265
      %p267 = scmp.ne.s32.totalorder %s256, %s257
      %p268 = scmp.eq.s32.totalorder %s44, 0
      %p269 = por %p267, %p268
      %p270 = scmp.ne.s32.totalorder %s256, %s257
      %p271 = scmp.eq.s32.totalorder %s45, 2
      %p272 = por %p270, %p271
      %p274 = scmp.ne.s32.totalorder %s257, %s273
      %p275 = scmp.eq.s32.totalorder %s45, 0
      %p276 = por %p274, %p275
      %s277 = ssub.s32 %s39, %s46
      %p278 = scmp.eq.s32.totalorder %s277, 0
      %s280 = sadd.s32 %s279, 1
      %s281 = scalar_select %p278, %s279, %s280
      %p284 = pneg %p278
      %p285 = scmp.eq.s32.totalorder %s39, 2
      %p286 = por %p284, %p285
      %p287 = scmp.ne.s32.totalorder %s279, %s282
      %p288 = scmp.eq.s32.totalorder %s39, 0
      %p289 = por %p287, %p288
      %p290 = scmp.ne.s32.totalorder %s279, %s282
      %p291 = scmp.eq.s32.totalorder %s44, 2
      %p292 = por %p290, %p291
      %p293 = scmp.ne.s32.totalorder %s282, %s283
      %p294 = scmp.eq.s32.totalorder %s44, 0
      %p295 = por %p293, %p294
      %p296 = scmp.ne.s32.totalorder %s282, %s283
      %p297 = scmp.eq.s32.totalorder %s45, 2
      %p298 = por %p296, %p297
      %p300 = scmp.ne.s32.totalorder %s283, %s299
      %p301 = scmp.eq.s32.totalorder %s45, 0
      %p302 = por %p300, %p301
      %s303 = ssub.s32 %s39, %s46
      %p304 = scmp.eq.s32.totalorder %s303, 0
      %s306 = sadd.s32 %s305, 1
      %s307 = scalar_select %p304, %s305, %s306
      %p310 = pneg %p304
      %p311 = scmp.eq.s32.totalorder %s39, 2
      %p312 = por %p310, %p311
      %p313 = scmp.ne.s32.totalorder %s305, %s308
      %p314 = scmp.eq.s32.totalorder %s39, 0
      %p315 = por %p313, %p314
      %p316 = scmp.ne.s32.totalorder %s305, %s308
      %p317 = scmp.eq.s32.totalorder %s44, 2
      %p318 = por %p316, %p317
      %p319 = scmp.ne.s32.totalorder %s308, %s309
      %p320 = scmp.eq.s32.totalorder %s44, 0
      %p321 = por %p319, %p320
      %p322 = scmp.ne.s32.totalorder %s308, %s309
      %p323 = scmp.eq.s32.totalorder %s45, 2
      %p324 = por %p322, %p323
      %p326 = scmp.ne.s32.totalorder %s309, %s325
      %p327 = scmp.eq.s32.totalorder %s45, 0
      %p328 = por %p326, %p327
      %s329 = ssub.s32 %s39, %s46
      %p330 = scmp.eq.s32.totalorder %s329, 0
      %s332 = sadd.s32 %s331, 1
      %s333 = scalar_select %p330, %s331, %s332
      %p336 = pneg %p330
      %p337 = scmp.eq.s32.totalorder %s39, 2
      %p338 = por %p336, %p337
      %p339 = scmp.ne.s32.totalorder %s331, %s334
      %p340 = scmp.eq.s32.totalorder %s39, 0
      %p341 = por %p339, %p340
      %p342 = scmp.ne.s32.totalorder %s331, %s334
      %p343 = scmp.eq.s32.totalorder %s44, 2
      %p344 = por %p342, %p343
      %p345 = scmp.ne.s32.totalorder %s334, %s335
      %p346 = scmp.eq.s32.totalorder %s44, 0
      %p347 = por %p345, %p346
      %p348 = scmp.ne.s32.totalorder %s334, %s335
      %p349 = scmp.eq.s32.totalorder %s45, 2
      %p350 = por %p348, %p349
      %p352 = scmp.ne.s32.totalorder %s335, %s351
      %p353 = scmp.eq.s32.totalorder %s45, 0
      %p354 = por %p352, %p353
      %s355 = ssub.s32 %s39, %s46
      %p356 = scmp.eq.s32.totalorder %s355, 0
      %s358 = sadd.s32 %s357, 1
      %s359 = scalar_select %p356, %s357, %s358
      %p362 = pneg %p356
      %p363 = scmp.eq.s32.totalorder %s39, 2
      %p364 = por %p362, %p363
      %p365 = scmp.ne.s32.totalorder %s357, %s360
      %p366 = scmp.eq.s32.totalorder %s39, 0
      %p367 = por %p365, %p366
      %p368 = scmp.ne.s32.totalorder %s357, %s360
      %p369 = scmp.eq.s32.totalorder %s44, 2
      %p370 = por %p368, %p369
      %p371 = scmp.ne.s32.totalorder %s360, %s361
      %p372 = scmp.eq.s32.totalorder %s44, 0
      %p373 = por %p371, %p372
      %p374 = scmp.ne.s32.totalorder %s360, %s361
      %p375 = scmp.eq.s32.totalorder %s45, 2
      %p376 = por %p374, %p375
      %p378 = scmp.ne.s32.totalorder %s361, %s377
      %p379 = scmp.eq.s32.totalorder %s45, 0
      %p380 = por %p378, %p379
      %s381 = ssub.s32 %s39, %s46
      %p382 = scmp.eq.s32.totalorder %s381, 0
      %s384 = sadd.s32 %s383, 1
      %s385 = scalar_select %p382, %s383, %s384
      %p388 = pneg %p382
      %p389 = scmp.eq.s32.totalorder %s39, 2
      %p390 = por %p388, %p389
      %p391 = scmp.ne.s32.totalorder %s383, %s386
      %p392 = scmp.eq.s32.totalorder %s39, 0
      %p393 = por %p391, %p392
      %p394 = scmp.ne.s32.totalorder %s383, %s386
      %p395 = scmp.eq.s32.totalorder %s44, 2
      %p396 = por %p394, %p395
      %p397 = scmp.ne.s32.totalorder %s386, %s387
      %p398 = scmp.eq.s32.totalorder %s44, 0
      %p399 = por %p397, %p398
      %p400 = scmp.ne.s32.totalorder %s386, %s387
      %p401 = scmp.eq.s32.totalorder %s45, 2
      %p402 = por %p400, %p401
      %p404 = scmp.ne.s32.totalorder %s387, %s403
      %p405 = scmp.eq.s32.totalorder %s45, 0
      %p406 = por %p404, %p405
      %s407 = ssub.s32 %s39, %s46
      %p408 = scmp.eq.s32.totalorder %s407, 0
      %s410 = sadd.s32 %s409, 1
      %s411 = scalar_select %p408, %s409, %s410
      %p414 = pneg %p408
      %p415 = scmp.eq.s32.totalorder %s39, 2
      %p416 = por %p414, %p415
      %p417 = scmp.ne.s32.totalorder %s409, %s412
      %p418 = scmp.eq.s32.totalorder %s39, 0
      %p419 = por %p417, %p418
      %p420 = scmp.ne.s32.totalorder %s409, %s412
      %p421 = scmp.eq.s32.totalorder %s44, 2
      %p422 = por %p420, %p421
      %p423 = scmp.ne.s32.totalorder %s412, %s413
      %p424 = scmp.eq.s32.totalorder %s44, 0
      %p425 = por %p423, %p424
      %p426 = scmp.ne.s32.totalorder %s412, %s413
      %p427 = scmp.eq.s32.totalorder %s45, 2
      %p428 = por %p426, %p427
      %p430 = scmp.ne.s32.totalorder %s413, %s429
      %p431 = scmp.eq.s32.totalorder %s45, 0
      %p432 = por %p430, %p431
      %s434 = sadd.s32 %s433, 1
      %p437 = scmp.eq.s32.totalorder %s39, 2
      %p438 = scmp.ne.s32.totalorder %s433, %s435
      %p439 = scmp.eq.s32.totalorder %s39, 0
      %p440 = por %p438, %p439
      %p441 = scmp.ne.s32.totalorder %s433, %s435
      %p442 = scmp.eq.s32.totalorder %s44, 2
      %p443 = por %p441, %p442
      %p444 = scmp.ne.s32.totalorder %s435, %s436
      %p445 = scmp.eq.s32.totalorder %s44, 0
      %p446 = por %p444, %p445
      %p447 = scmp.ne.s32.totalorder %s435, %s436
      %p448 = scmp.eq.s32.totalorder %s45, 2
      %p449 = por %p447, %p448
      %p451 = scmp.ne.s32.totalorder %s436, %s450
      %p452 = scmp.eq.s32.totalorder %s45, 0
      %p453 = por %p451, %p452
      %s455 = sadd.s32 %s454, 1
      %p458 = scmp.eq.s32.totalorder %s39, 2
      %p459 = scmp.ne.s32.totalorder %s454, %s456
      %p460 = scmp.eq.s32.totalorder %s39, 0
      %p461 = por %p459, %p460
      %p462 = scmp.ne.s32.totalorder %s454, %s456
      %p463 = scmp.eq.s32.totalorder %s44, 2
      %p464 = por %p462, %p463
      %p465 = scmp.ne.s32.totalorder %s456, %s457
      %p466 = scmp.eq.s32.totalorder %s44, 0
      %p467 = por %p465, %p466
      %p468 = scmp.ne.s32.totalorder %s456, %s457
      %p469 = scmp.eq.s32.totalorder %s45, 2
      %p470 = por %p468, %p469
      %p472 = scmp.ne.s32.totalorder %s457, %s471
      %p473 = scmp.eq.s32.totalorder %s45, 0
      %p474 = por %p472, %p473
      %s476 = sadd.s32 %s475, 1
      %p479 = scmp.eq.s32.totalorder %s39, 2
      %p480 = scmp.ne.s32.totalorder %s475, %s477
      %p481 = scmp.eq.s32.totalorder %s39, 0
      %p482 = por %p480, %p481
      %p483 = scmp.ne.s32.totalorder %s475, %s477
      %p484 = scmp.eq.s32.totalorder %s44, 2
      %p485 = por %p483, %p484
      %p486 = scmp.ne.s32.totalorder %s477, %s478
      %p487 = scmp.eq.s32.totalorder %s44, 0
      %p488 = por %p486, %p487
      %p489 = scmp.ne.s32.totalorder %s477, %s478
      %p490 = scmp.eq.s32.totalorder %s45, 2
      %p491 = por %p489, %p490
      %p493 = scmp.ne.s32.totalorder %s478, %s492
      %p494 = scmp.eq.s32.totalorder %s45, 0
      %p495 = por %p493, %p494
      %s497 = sadd.s32 %s496, 1
      %p500 = scmp.eq.s32.totalorder %s39, 2
      %p501 = scmp.ne.s32.totalorder %s496, %s498
      %p502 = scmp.eq.s32.totalorder %s39, 0
      %p503 = por %p501, %p502
      %p504 = scmp.ne.s32.totalorder %s496, %s498
      %p505 = scmp.eq.s32.totalorder %s44, 2
      %p506 = por %p504, %p505
      %p507 = scmp.ne.s32.totalorder %s498, %s499
      %p508 = scmp.eq.s32.totalorder %s44, 0
      %p509 = por %p507, %p508
      %p510 = scmp.ne.s32.totalorder %s498, %s499
      %p511 = scmp.eq.s32.totalorder %s45, 2
      %p512 = por %p510, %p511
      %p514 = scmp.ne.s32.totalorder %s499, %s513
      %p515 = scmp.eq.s32.totalorder %s45, 0
      %p516 = por %p514, %p515
      %s518 = sadd.s32 %s517, 1
      %p521 = scmp.eq.s32.totalorder %s39, 2
      %p522 = scmp.ne.s32.totalorder %s517, %s519
      %p523 = scmp.eq.s32.totalorder %s39, 0
      %p524 = por %p522, %p523
      %p525 = scmp.ne.s32.totalorder %s517, %s519
      %p526 = scmp.eq.s32.totalorder %s44, 2
      %p527 = por %p525, %p526
      %p528 = scmp.ne.s32.totalorder %s519, %s520
      %p529 = scmp.eq.s32.totalorder %s44, 0
      %p530 = por %p528, %p529
      %p531 = scmp.ne.s32.totalorder %s519, %s520
      %p532 = scmp.eq.s32.totalorder %s45, 2
      %p533 = por %p531, %p532
      %p535 = scmp.ne.s32.totalorder %s520, %s534
      %p536 = scmp.eq.s32.totalorder %s45, 0
      %p537 = por %p535, %p536
      %s539 = sadd.s32 %s538, 1
      %p542 = scmp.eq.s32.totalorder %s39, 2
      %p543 = scmp.ne.s32.totalorder %s538, %s540
      %p544 = scmp.eq.s32.totalorder %s39, 0
      %p545 = por %p543, %p544
      %p546 = scmp.ne.s32.totalorder %s538, %s540
      %p547 = scmp.eq.s32.totalorder %s44, 2
      %p548 = por %p546, %p547
      %p549 = scmp.ne.s32.totalorder %s540, %s541
      %p550 = scmp.eq.s32.totalorder %s44, 0
      %p551 = por %p549, %p550
      %p552 = scmp.ne.s32.totalorder %s540, %s541
      %p553 = scmp.eq.s32.totalorder %s45, 2
      %p554 = por %p552, %p553
      %p556 = scmp.ne.s32.totalorder %s541, %s555
      %p557 = scmp.eq.s32.totalorder %s45, 0
      %p558 = por %p556, %p557
      %s560 = sadd.s32 %s559, 1
      %p563 = scmp.eq.s32.totalorder %s39, 2
      %p564 = scmp.ne.s32.totalorder %s559, %s561
      %p565 = scmp.eq.s32.totalorder %s39, 0
      %p566 = por %p564, %p565
      %p567 = scmp.ne.s32.totalorder %s559, %s561
      %p568 = scmp.eq.s32.totalorder %s44, 2
      %p569 = por %p567, %p568
      %p570 = scmp.ne.s32.totalorder %s561, %s562
      %p571 = scmp.eq.s32.totalorder %s44, 0
      %p572 = por %p570, %p571
      %p573 = scmp.ne.s32.totalorder %s561, %s562
      %p574 = scmp.eq.s32.totalorder %s45, 2
      %p575 = por %p573, %p574
      %p577 = scmp.ne.s32.totalorder %s562, %s576
      %p578 = scmp.eq.s32.totalorder %s45, 0
      %p579 = por %p577, %p578
      %s581 = sadd.s32 %s580, 1
      %p584 = scmp.eq.s32.totalorder %s39, 2
      %p585 = scmp.ne.s32.totalorder %s580, %s582
      %p586 = scmp.eq.s32.totalorder %s39, 0
      %p587 = por %p585, %p586
      %p588 = scmp.ne.s32.totalorder %s580, %s582
      %p589 = scmp.eq.s32.totalorder %s44, 2
      %p590 = por %p588, %p589
      %p591 = scmp.ne.s32.totalorder %s582, %s583
      %p592 = scmp.eq.s32.totalorder %s44, 0
      %p593 = por %p591, %p592
      %p594 = scmp.ne.s32.totalorder %s582, %s583
      %p595 = scmp.eq.s32.totalorder %s45, 2
      %p596 = por %p594, %p595
      %p598 = scmp.ne.s32.totalorder %s583, %s597
      %p599 = scmp.eq.s32.totalorder %s45, 0
      %p600 = por %p598, %p599
      %s602 = sadd.s32 %s601, 1
      %p605 = scmp.eq.s32.totalorder %s39, 2
      %p606 = scmp.ne.s32.totalorder %s601, %s603
      %p607 = scmp.eq.s32.totalorder %s39, 0
      %p608 = por %p606, %p607
      %p609 = scmp.ne.s32.totalorder %s601, %s603
      %p610 = scmp.eq.s32.totalorder %s44, 2
      %p611 = por %p609, %p610
      %p612 = scmp.ne.s32.totalorder %s603, %s604
      %p613 = scmp.eq.s32.totalorder %s44, 0
      %p614 = por %p612, %p613
      %p615 = scmp.ne.s32.totalorder %s603, %s604
      %p616 = scmp.eq.s32.totalorder %s45, 2
      %p617 = por %p615, %p616
      %p619 = scmp.ne.s32.totalorder %s604, %s618
      %p620 = scmp.eq.s32.totalorder %s45, 0
      %p621 = por %p619, %p620
      %p622 = scmp.le.s32.totalorder 1, %s39
      %p623 = scmp.lt.s32.totalorder %s39, 4
      %p624 = pnand %p622, %p623
      %p625 = pneg %p624
      // Predicated region
      $region9: #{tpu_custom_call.1} parent=5 // pred_check
        _
      $region10: #{tpu_custom_call.1} parent=5 // pred_check_branch
        %627 = sbr.rel (%p624) target = $region12
      $region11: #{tpu_custom_call.1} parent=5 // pred_region
        %s628 = ssub.s32 %s39, 1
        // Predicated region
        $region13: #{tpu_custom_call.1} parent=11 // pred_check
          %p629 = pneg %p60
        $region14: #{tpu_custom_call.1} parent=11 // pred_check_branch
          %631 = sbr.rel (%p629) target = $region16
        $region15: #{tpu_custom_call.1} parent=11 // pred_region
          _
        $region16: #{tpu_custom_call.1} parent=11 // pred_fallthru
          _
        // Predicated region
        $region17: #{tpu_custom_call.1} parent=11 // pred_check
          %p632 = pneg %p81
        $region18: #{tpu_custom_call.1} parent=11 // pred_check_branch
          %634 = sbr.rel (%p632) target = $region20
        $region19: #{tpu_custom_call.1} parent=11 // pred_region
          %s636 = ssub.s32 32, 32
          %637 = vsyncadd [#allocation5], %s636
          %s639 = sshll.u32 [#allocation4], 4
          %s640 = int_to_ptr.vmem [resolvable:$true] %s639
          %642 = dma.hbm_to_vmem [thread:$0]  %s1, 32, %s640, [#allocation5]
        $region20: #{tpu_custom_call.1} parent=11 // pred_fallthru
          _
        // Predicated region
        $region21: #{tpu_custom_call.1} parent=11 // pred_check
          %p643 = pneg %p102
        $region22: #{tpu_custom_call.1} parent=11 // pred_check_branch
          %645 = sbr.rel (%p643) target = $region24
        $region23: #{tpu_custom_call.1} parent=11 // pred_region
          _
        $region24: #{tpu_custom_call.1} parent=11 // pred_fallthru
          _
        // Predicated region
        $region25: #{tpu_custom_call.1} parent=11 // pred_check
          %p646 = pneg %p123
        $region26: #{tpu_custom_call.1} parent=11 // pred_check_branch
          %648 = sbr.rel (%p646) target = $region28
        $region27: #{tpu_custom_call.1} parent=11 // pred_region
          _
        $region28: #{tpu_custom_call.1} parent=11 // pred_fallthru
          _
        // Predicated region
        $region29: #{tpu_custom_call.1} parent=11 // pred_check
          %p649 = pneg %p144
        $region30: #{tpu_custom_call.1} parent=11 // pred_check_branch
          %651 = sbr.rel (%p649) target = $region32
        $region31: #{tpu_custom_call.1} parent=11 // pred_region
          _
        $region32: #{tpu_custom_call.1} parent=11 // pred_fallthru
          _
        // Predicated region
        $region33: #{tpu_custom_call.1} parent=11 // pred_check
          %p652 = pneg %p165
        $region34: #{tpu_custom_call.1} parent=11 // pred_check_branch
          %654 = sbr.rel (%p652) target = $region36
        $region35: #{tpu_custom_call.1} parent=11 // pred_region
          _
        $region36: #{tpu_custom_call.1} parent=11 // pred_fallthru
          _
        // Predicated region
        $region37: #{tpu_custom_call.1} parent=11 // pred_check
          %p655 = pneg %p446
        $region38: #{tpu_custom_call.1} parent=11 // pred_check_branch
          %657 = sbr.rel (%p655) target = $region40
        $region39: #{tpu_custom_call.1} parent=11 // pred_region
          %s659 = ssub.s32 2048, 2048
          %660 = vsyncadd [#allocation11], %s659
          %s661 = sshll.u32 [#allocation12], 4
          %s662 = int_to_ptr.vmem [resolvable:$true] %s661
          %667 = dma.hbm_to_vmem [thread:$0]  %s16, 2048, %s662, [#allocation11], 128, 128, 8
        $region40: #{tpu_custom_call.1} parent=11 // pred_fallthru
          _
        // Predicated region
        $region41: #{tpu_custom_call.1} parent=11 // pred_check
          %p668 = pneg %p467
        $region42: #{tpu_custom_call.1} parent=11 // pred_check_branch
          %670 = sbr.rel (%p668) target = $region44
        $region43: #{tpu_custom_call.1} parent=11 // pred_region
          _
        $region44: #{tpu_custom_call.1} parent=11 // pred_fallthru
          _
        // Predicated region
        $region45: #{tpu_custom_call.1} parent=11 // pred_check
          %p671 = pneg %p488
        $region46: #{tpu_custom_call.1} parent=11 // pred_check_branch
          %673 = sbr.rel (%p671) target = $region48
        $region47: #{tpu_custom_call.1} parent=11 // pred_region
          _
        $region48: #{tpu_custom_call.1} parent=11 // pred_fallthru
          _
        // Predicated region
        $region49: #{tpu_custom_call.1} parent=11 // pred_check
          %p674 = pneg %p509
        $region50: #{tpu_custom_call.1} parent=11 // pred_check_branch
          %676 = sbr.rel (%p674) target = $region52
        $region51: #{tpu_custom_call.1} parent=11 // pred_region
          _
        $region52: #{tpu_custom_call.1} parent=11 // pred_fallthru
          _
        // Predicated region
        $region53: #{tpu_custom_call.1} parent=11 // pred_check
          %p677 = pneg %p530
        $region54: #{tpu_custom_call.1} parent=11 // pred_check_branch
          %679 = sbr.rel (%p677) target = $region56
        $region55: #{tpu_custom_call.1} parent=11 // pred_region
          %s681 = ssub.s32 2048, 2048
          %682 = vsyncadd [#allocation14], %s681
          %s683 = sshll.u32 [#allocation13], 4
          %s684 = int_to_ptr.vmem [resolvable:$true] %s683
          %689 = dma.hbm_to_vmem [thread:$0]  %s20, 2048, %s684, [#allocation14], 128, 128, 8
        $region56: #{tpu_custom_call.1} parent=11 // pred_fallthru
          _
        // Predicated region
        $region57: #{tpu_custom_call.1} parent=11 // pred_check
          %p690 = pneg %p551
        $region58: #{tpu_custom_call.1} parent=11 // pred_check_branch
          %692 = sbr.rel (%p690) target = $region60
        $region59: #{tpu_custom_call.1} parent=11 // pred_region
          _
        $region60: #{tpu_custom_call.1} parent=11 // pred_fallthru
          _
        // Predicated region
        $region61: #{tpu_custom_call.1} parent=11 // pred_check
          %p693 = pneg %p572
        $region62: #{tpu_custom_call.1} parent=11 // pred_check_branch
          %695 = sbr.rel (%p693) target = $region64
        $region63: #{tpu_custom_call.1} parent=11 // pred_region
          _
        $region64: #{tpu_custom_call.1} parent=11 // pred_fallthru
          _
        // Predicated region
        $region65: #{tpu_custom_call.1} parent=11 // pred_check
          %p696 = pneg %p593
        $region66: #{tpu_custom_call.1} parent=11 // pred_check_branch
          %698 = sbr.rel (%p696) target = $region68
        $region67: #{tpu_custom_call.1} parent=11 // pred_region
          _
        $region68: #{tpu_custom_call.1} parent=11 // pred_fallthru
          _
      $region12: #{tpu_custom_call.1} parent=5 // pred_fallthru
        _
      %p699 = scmp.lt.s32.totalorder %s39, 3
      // Predicated region
      $region69: #{tpu_custom_call.1} parent=5 // pred_check
        %p700 = pneg %p699
      $region70: #{tpu_custom_call.1} parent=5 // pred_check_branch
        %702 = sbr.rel (%p700) target = $region72
      $region71: #{tpu_custom_call.1} parent=5 // pred_region
        // Predicated region
        $region73: #{tpu_custom_call.1} parent=71 // pred_check
          %p703 = pneg %p185
        $region74: #{tpu_custom_call.1} parent=71 // pred_check_branch
          %705 = sbr.rel (%p703) target = $region76
        $region75: #{tpu_custom_call.1} parent=71 // pred_region
          %p706 = scmp.lt.s32.totalorder %s39, 2
          %s707 = scalar_select %p706, %s39, 2
          %s708 = scalar_lea.vmem %s6, %s707
        $region76: #{tpu_custom_call.1} parent=71 // pred_fallthru
          _
        // Predicated region
        $region77: #{tpu_custom_call.1} parent=71 // pred_check
          %p709 = pneg %p211
        $region78: #{tpu_custom_call.1} parent=71 // pred_check_branch
          %711 = sbr.rel (%p709) target = $region80
        $region79: #{tpu_custom_call.1} parent=71 // pred_region
          %s712 = sand.u32 %s39, 1
          %s713 = scalar_lea.sflag [#allocation8], %s712
          %s714 = sand.u32 %s201, 1
          %s715 = smul.addr %s714, 48
          %s716 = scalar_lea.vmem [#allocation7], %s715
          %s718 = ssub.s32 768, 768
          %719 = vsyncadd %s713, %s718
          %s720 = smul.addr %s39, 6
          %s721 = smul.addr %s720, 128
          %s722 = scalar_lea.hbm %s7, %s721
          %s723 = sshll.u32 %s716, 4
          %s724 = int_to_ptr.vmem [resolvable:$true] %s723
          %729 = dma.hbm_to_vmem [thread:$0]  %s722, 768, %s724, %s713, 128, 128, 8
        $region80: #{tpu_custom_call.1} parent=71 // pred_fallthru
          _
        // Predicated region
        $region81: #{tpu_custom_call.1} parent=71 // pred_check
          %p730 = pneg %p237
        $region82: #{tpu_custom_call.1} parent=71 // pred_check_branch
          %732 = sbr.rel (%p730) target = $region84
        $region83: #{tpu_custom_call.1} parent=71 // pred_region
          %s733 = sand.u32 %s39, 1
          %s734 = scalar_lea.sflag [#allocation8], %s733
          %s735 = sand.u32 %s227, 1
          %s736 = smul.addr %s735, 128
          %s737 = scalar_lea.vmem [#allocation9], %s736
          %s739 = ssub.s32 2048, 2048
          %740 = vsyncadd %s734, %s739
          %s741 = smul.addr %s39, 16
          %s742 = smul.addr %s741, 128
          %s743 = scalar_lea.hbm %s8, %s742
          %s744 = sshll.u32 %s737, 4
          %s745 = int_to_ptr.vmem [resolvable:$true] %s744
          %750 = dma.hbm_to_vmem [thread:$0]  %s743, 2048, %s745, %s734, 128, 128, 8
        $region84: #{tpu_custom_call.1} parent=71 // pred_fallthru
          _
        // Predicated region
        $region85: #{tpu_custom_call.1} parent=71 // pred_check
          %p751 = pneg %p263
        $region86: #{tpu_custom_call.1} parent=71 // pred_check_branch
          %753 = sbr.rel (%p751) target = $region88
        $region87: #{tpu_custom_call.1} parent=71 // pred_region
          %p754 = scmp.lt.s32.totalorder %s39, 2
          %s755 = scalar_select %p754, %s39, 2
          %s756 = scalar_lea.vmem %s9, %s755
        $region88: #{tpu_custom_call.1} parent=71 // pred_fallthru
          _
        // Predicated region
        $region89: #{tpu_custom_call.1} parent=71 // pred_check
          %p757 = pneg %p289
        $region90: #{tpu_custom_call.1} parent=71 // pred_check_branch
          %759 = sbr.rel (%p757) target = $region92
        $region91: #{tpu_custom_call.1} parent=71 // pred_region
          %p760 = scmp.lt.s32.totalorder %s39, 2
          %s761 = scalar_select %p760, %s39, 2
          %s762 = scalar_lea.vmem %s10, %s761
        $region92: #{tpu_custom_call.1} parent=71 // pred_fallthru
          _
        // Predicated region
        $region93: #{tpu_custom_call.1} parent=71 // pred_check
          %p763 = pneg %p315
        $region94: #{tpu_custom_call.1} parent=71 // pred_check_branch
          %765 = sbr.rel (%p763) target = $region96
        $region95: #{tpu_custom_call.1} parent=71 // pred_region
          %p766 = scmp.lt.s32.totalorder %s39, 2
          %s767 = scalar_select %p766, %s39, 2
          %s768 = scalar_lea.vmem %s11, %s767
        $region96: #{tpu_custom_call.1} parent=71 // pred_fallthru
          _
        // Predicated region
        $region97: #{tpu_custom_call.1} parent=71 // pred_check
          %p769 = pneg %p341
        $region98: #{tpu_custom_call.1} parent=71 // pred_check_branch
          %771 = sbr.rel (%p769) target = $region100
        $region99: #{tpu_custom_call.1} parent=71 // pred_region
          %s772 = sand.u32 %s39, 1
          %s773 = scalar_lea.sflag [#allocation11], %s772
          %s774 = sand.u32 %s331, 1
          %s775 = smul.addr %s774, 128
          %s776 = scalar_lea.vmem [#allocation10], %s775
          %s778 = ssub.s32 2048, 2048
          %779 = vsyncadd %s773, %s778
          %s780 = smul.addr %s39, 16
          %s781 = smul.addr %s780, 128
          %s782 = scalar_lea.hbm %s12, %s781
          %s783 = sshll.u32 %s776, 4
          %s784 = int_to_ptr.vmem [resolvable:$true] %s783
          %789 = dma.hbm_to_vmem [thread:$0]  %s782, 2048, %s784, %s773, 128, 128, 8
        $region100: #{tpu_custom_call.1} parent=71 // pred_fallthru
          _
        // Predicated region
        $region101: #{tpu_custom_call.1} parent=71 // pred_check
          %p790 = pneg %p367
        $region102: #{tpu_custom_call.1} parent=71 // pred_check_branch
          %792 = sbr.rel (%p790) target = $region104
        $region103: #{tpu_custom_call.1} parent=71 // pred_region
          %p793 = scmp.lt.s32.totalorder %s39, 2
          %s794 = scalar_select %p793, %s39, 2
          %s795 = scalar_lea.vmem %s13, %s794
        $region104: #{tpu_custom_call.1} parent=71 // pred_fallthru
          _
        // Predicated region
        $region105: #{tpu_custom_call.1} parent=71 // pred_check
          %p796 = pneg %p393
        $region106: #{tpu_custom_call.1} parent=71 // pred_check_branch
          %798 = sbr.rel (%p796) target = $region108
        $region107: #{tpu_custom_call.1} parent=71 // pred_region
          %p799 = scmp.lt.s32.totalorder %s39, 2
          %s800 = scalar_select %p799, %s39, 2
          %s801 = scalar_lea.vmem %s14, %s800
        $region108: #{tpu_custom_call.1} parent=71 // pred_fallthru
          _
        // Predicated region
        $region109: #{tpu_custom_call.1} parent=71 // pred_check
          %p802 = pneg %p419
        $region110: #{tpu_custom_call.1} parent=71 // pred_check_branch
          %804 = sbr.rel (%p802) target = $region112
        $region111: #{tpu_custom_call.1} parent=71 // pred_region
          %p805 = scmp.lt.s32.totalorder %s39, 2
          %s806 = scalar_select %p805, %s39, 2
          %s807 = scalar_lea.vmem %s15, %s806
        $region112: #{tpu_custom_call.1} parent=71 // pred_fallthru
          _
      $region72: #{tpu_custom_call.1} parent=5 // pred_fallthru
        _
      %p808 = scmp.le.s32.totalorder 1, %s39
      %p809 = scmp.lt.s32.totalorder %s39, 4
      %p810 = pnand %p808, %p809
      %p811 = pneg %p810
      // Predicated region
      $region113: #{tpu_custom_call.1} parent=5 // pred_check
        _
      $region114: #{tpu_custom_call.1} parent=5 // pred_check_branch
        %813 = sbr.rel (%p810) target = $region116
      $region115: #{tpu_custom_call.1} parent=5 // pred_region
        %s814 = ssub.s32 %s39, 1
        // Predicated region
        $region117: #{tpu_custom_call.1} parent=115 // pred_check
          %p815 = pneg %p81
        $region118: #{tpu_custom_call.1} parent=115 // pred_check_branch
          %817 = sbr.rel (%p815) target = $region120
        $region119: #{tpu_custom_call.1} parent=115 // pred_region
          %818 = dma.done [#allocation5], 32
        $region120: #{tpu_custom_call.1} parent=115 // pred_fallthru
          _
        %s819 = sand.u32 %s44, 1
        %s820 = scalar_lea.sflag [#allocation8], %s819
        %s821 = sand.u32 %s204, 1
        %s822 = smul.addr %s821, 48
        %s823 = scalar_lea.vmem [#allocation7], %s822
        // Predicated region
        $region121: #{tpu_custom_call.1} parent=115 // pred_check
          %p824 = pneg %p217
        $region122: #{tpu_custom_call.1} parent=115 // pred_check_branch
          %826 = sbr.rel (%p824) target = $region124
        $region123: #{tpu_custom_call.1} parent=115 // pred_region
          %827 = dma.done %s820, 768
        $region124: #{tpu_custom_call.1} parent=115 // pred_fallthru
          _
        %s828 = sand.u32 %s44, 1
        %s829 = scalar_lea.sflag [#allocation8], %s828
        %s830 = sand.u32 %s230, 1
        %s831 = smul.addr %s830, 128
        %s832 = scalar_lea.vmem [#allocation9], %s831
        // Predicated region
        $region125: #{tpu_custom_call.1} parent=115 // pred_check
          %p833 = pneg %p243
        $region126: #{tpu_custom_call.1} parent=115 // pred_check_branch
          %835 = sbr.rel (%p833) target = $region128
        $region127: #{tpu_custom_call.1} parent=115 // pred_region
          %836 = dma.done %s829, 2048
        $region128: #{tpu_custom_call.1} parent=115 // pred_fallthru
          _
        %s837 = sand.u32 %s44, 1
        %s838 = scalar_lea.sflag [#allocation11], %s837
        %s839 = sand.u32 %s334, 1
        %s840 = smul.addr %s839, 128
        %s841 = scalar_lea.vmem [#allocation10], %s840
        // Predicated region
        $region129: #{tpu_custom_call.1} parent=115 // pred_check
          %p842 = pneg %p347
        $region130: #{tpu_custom_call.1} parent=115 // pred_check_branch
          %844 = sbr.rel (%p842) target = $region132
        $region131: #{tpu_custom_call.1} parent=115 // pred_region
          %845 = dma.done %s838, 2048
        $region132: #{tpu_custom_call.1} parent=115 // pred_fallthru
          _
        // Predicated region
        $region133: #{tpu_custom_call.1} parent=115 // pred_check
          %p846 = pneg %p446
        $region134: #{tpu_custom_call.1} parent=115 // pred_check_branch
          %848 = sbr.rel (%p846) target = $region136
        $region135: #{tpu_custom_call.1} parent=115 // pred_region
          %849 = dma.done [#allocation11], 2048
        $region136: #{tpu_custom_call.1} parent=115 // pred_fallthru
          _
        // Predicated region
        $region137: #{tpu_custom_call.1} parent=115 // pred_check
          %p850 = pneg %p530
        $region138: #{tpu_custom_call.1} parent=115 // pred_check_branch
          %852 = sbr.rel (%p850) target = $region140
        $region139: #{tpu_custom_call.1} parent=115 // pred_region
          %853 = dma.done [#allocation14], 2048
        $region140: #{tpu_custom_call.1} parent=115 // pred_fallthru
          _
        %p854 = pneg %p60
        %p855 = pneg %p57
        %p856 = pneg %p81
        %p857 = pneg %p78
        %p858 = pneg %p102
        %p859 = pneg %p99
        %p860 = pneg %p123
        %p861 = pneg %p120
        %p862 = pneg %p144
        %p863 = pneg %p141
        %p864 = pneg %p165
        %p865 = pneg %p162
        %p866 = scmp.lt.s32.totalorder %s44, 2
        %s867 = scalar_select %p866, %s44, 2
        %s868 = scalar_lea.vmem %s6, %s867
        %p869 = pneg %p191
        %p870 = pneg %p188
        %s871 = sand.u32 %s44, 1
        %s872 = scalar_lea.sflag [#allocation8], %s871
        %s873 = sand.u32 %s204, 1
        %s874 = smul.addr %s873, 48
        %s875 = scalar_lea.vmem [#allocation7], %s874
        %p876 = pneg %p217
        %p877 = pneg %p214
        %s878 = sand.u32 %s44, 1
        %s879 = scalar_lea.sflag [#allocation8], %s878
        %s880 = sand.u32 %s230, 1
        %s881 = smul.addr %s880, 128
        %s882 = scalar_lea.vmem [#allocation9], %s881
        %p883 = pneg %p243
        %p884 = pneg %p240
        %p885 = scmp.lt.s32.totalorder %s44, 2
        %s886 = scalar_select %p885, %s44, 2
        %s887 = scalar_lea.vmem %s9, %s886
        %p888 = pneg %p269
        %p889 = pneg %p266
        %p890 = scmp.lt.s32.totalorder %s44, 2
        %s891 = scalar_select %p890, %s44, 2
        %s892 = scalar_lea.vmem %s10, %s891
        %p893 = pneg %p295
        %p894 = pneg %p292
        %p895 = scmp.lt.s32.totalorder %s44, 2
        %s896 = scalar_select %p895, %s44, 2
        %s897 = scalar_lea.vmem %s11, %s896
        %p898 = pneg %p321
        %p899 = pneg %p318
        %s900 = sand.u32 %s44, 1
        %s901 = scalar_lea.sflag [#allocation11], %s900
        %s902 = sand.u32 %s334, 1
        %s903 = smul.addr %s902, 128
        %s904 = scalar_lea.vmem [#allocation10], %s903
        %p905 = pneg %p347
        %p906 = pneg %p344
        %p907 = scmp.lt.s32.totalorder %s44, 2
        %s908 = scalar_select %p907, %s44, 2
        %s909 = scalar_lea.vmem %s13, %s908
        %p910 = pneg %p373
        %p911 = pneg %p370
        %p912 = scmp.lt.s32.totalorder %s44, 2
        %s913 = scalar_select %p912, %s44, 2
        %s914 = scalar_lea.vmem %s14, %s913
        %p915 = pneg %p399
        %p916 = pneg %p396
        %p917 = scmp.lt.s32.totalorder %s44, 2
        %s918 = scalar_select %p917, %s44, 2
        %s919 = scalar_lea.vmem %s15, %s918
        %p920 = pneg %p425
        %p921 = pneg %p422
        %p922 = pneg %p446
        %p923 = pneg %p443
        %p924 = pneg %p467
        %p925 = pneg %p464
        %p926 = pneg %p488
        %p927 = pneg %p485
        %p928 = pneg %p509
        %p929 = pneg %p506
        %p930 = pneg %p530
        %p931 = pneg %p527
        %p932 = pneg %p551
        %p933 = pneg %p548
        %p934 = pneg %p572
        %p935 = pneg %p569
        %p936 = pneg %p593
        %p937 = pneg %p590
        %p938 = pneg %p614
        %p939 = pneg %p611
        %p940 = scmp.lt.s32.totalorder %s44, 2
        %s941 = scalar_select %p940, %s44, 2
        %s942 = scalar_lea.vmem %s6, %s941
        %p943 = scmp.lt.s32.totalorder %s44, 2
        %s944 = scalar_select %p943, %s44, 2
        %s945 = scalar_lea.vmem %s9, %s944
        %p946 = scmp.lt.s32.totalorder %s44, 2
        %s947 = scalar_select %p946, %s44, 2
        %s948 = scalar_lea.vmem %s10, %s947
        %p949 = scmp.lt.s32.totalorder %s44, 2
        %s950 = scalar_select %p949, %s44, 2
        %s951 = scalar_lea.vmem %s11, %s950
        %p952 = scmp.lt.s32.totalorder %s44, 2
        %s953 = scalar_select %p952, %s44, 2
        %s954 = scalar_lea.vmem %s13, %s953
        %p955 = scmp.lt.s32.totalorder %s44, 2
        %s956 = scalar_select %p955, %s44, 2
        %s957 = scalar_lea.vmem %s14, %s956
        %p958 = scmp.lt.s32.totalorder %s44, 2
        %s959 = scalar_select %p958, %s44, 2
        %s960 = scalar_lea.vmem %s15, %s959
        %p962 = scmp.eq.s32.totalorder %s44, 0
        // Predicated region
        $region141: #{tpu_custom_call.1} parent=115 // pred_check
          %p963 = pneg %p962
        $region142: #{tpu_custom_call.1} parent=115 // pred_check_branch
          %965 = sbr.rel (%p963) target = $region144
        $region143: #{tpu_custom_call.1} parent=115 // pred_region
          %v966 = vld [vmem:[%s0] sm:$0xff]
          %v967 = vld [vmem:[%s0 + $0x8] sm:$0xff]
          %968 = vst [vmem:[#allocation2] sm:$0xff] %v966
          %969 = vst [vmem:[#allocation2 + $0x8] sm:$0xff] %v967
          %v970 = vld [vmem:[#allocation4] sm:$0x3]
          %971 = vst [vmem:[#allocation3] sm:$0x3] %v970
        $region144: #{tpu_custom_call.1} parent=115 // pred_fallthru
          _
        %v972 = vld [vmem:[%s4] sm:$0xff]
        %v973 = vld [vmem:[%s4 + $0x8] sm:$0xff]
        %v974 = vld [vmem:[#allocation3] sm:$0x3]
        %vm975 = vcmask 15360
        %v977 = vsel %vm975, %v972, 0
        %v980 = vsel %vm975, %v973, 0
        %vm982 = vcmask 1041408
        %v984 = vsel %vm982, %v974, 0
        %986 = vmatprep.subr.mxu0 0.0
        %987 = vmatpush1.msra.mxu0 0.0
        %988 = vmatprep.subr.mxu0 0.0
        %989 = vmatpush1.msra.mxu0 0.0
        %990 = vmatprep.subr.mxu0 0.0
        %991 = vmatpush1.msra.mxu0 0.0
        %992 = vmatprep.subr.mxu0 0.0
        %993 = vmatpush1.msra.mxu0 0.0
        %994 = vmatprep.subr.mxu0 0.0
        %995 = vmatpush1.msra.mxu0 0.0
        %996 = vmatprep.subr.mxu0 0.0
        %997 = vmatpush1.msra.mxu0 0.0
        %998 = vmatprep.subr.mxu0 0.0
        %999 = vmatpush1.msra.mxu0 0.0
        %1000 = vmatprep.subr.mxu0 0.0
        %1001 = vmatpush1.msra.mxu0 0.0
        %1002 = vmatprep.subr.mxu0 0.0
        %1003 = vmatpush1.msra.mxu0 0.0
        %1004 = vmatprep.subr.mxu0 0.0
        %1005 = vmatpush1.msra.mxu0 0.0
        %1006 = vmatprep.subr.mxu0 0.0
        %1007 = vmatpush1.msra.mxu0 0.0
        %1008 = vmatprep.subr.mxu0 0.0
        %1009 = vmatpush1.msra.mxu0 0.0
        %1010 = vmatprep.subr.mxu0 0.0
        %1011 = vmatpush1.msra.mxu0 0.0
        %1012 = vmatprep.subr.mxu0 0.0
        %1013 = vmatpush1.msra.mxu0 0.0
        %1014 = vmatprep.subr.mxu0 0.0
        %1015 = vmatpush1.msra.mxu0 0.0
        %1016 = vmatprep.subr.mxu0 0.0
        %1017 = vmatpush1.msra.mxu0 %v984
        %1018 = vmatprep.subr.mxu0 0.0
        %1019 = vmatpush2.msra.mxu0 0.0
        %1020 = vmatprep.subr.mxu0 0.0
        %1021 = vmatpush2.msra.mxu0 0.0
        %1022 = vmatprep.subr.mxu0 0.0
        %1023 = vmatpush2.msra.mxu0 0.0
        %1024 = vmatprep.subr.mxu0 0.0
        %1025 = vmatpush2.msra.mxu0 0.0
        %1026 = vmatprep.subr.mxu0 0.0
        %1027 = vmatpush2.msra.mxu0 0.0
        %1028 = vmatprep.subr.mxu0 0.0
        %1029 = vmatpush2.msra.mxu0 0.0
        %1030 = vmatprep.subr.mxu0 0.0
        %1031 = vmatpush2.msra.mxu0 0.0
        %1032 = vmatprep.subr.mxu0 0.0
        %1033 = vmatpush2.msra.mxu0 0.0
        %1034 = vmatprep.subr.mxu0 0.0
        %1035 = vmatpush2.msra.mxu0 0.0
        %1036 = vmatprep.subr.mxu0 0.0
        %1037 = vmatpush2.msra.mxu0 0.0
        %1038 = vmatprep.subr.mxu0 0.0
        %1039 = vmatpush2.msra.mxu0 0.0
        %1040 = vmatprep.subr.mxu0 0.0
        %1041 = vmatpush2.msra.mxu0 0.0
        %1042 = vmatprep.subr.mxu0 0.0
        %1043 = vmatpush2.msra.mxu0 0.0
        %1044 = vmatprep.subr.mxu0 0.0
        %1045 = vmatpush2.msra.mxu0 0.0
        %1046 = vmatprep.subr.mxu0 0.0
        %1047 = vmatpush2.msra.mxu0 0.0
        %1048 = vmatprep.subr.mxu0 0.0
        %1049 = vmatpush2.msra.mxu0 0.0
        %1050 = vmatprep.mubr.f32.mxu0 0.0
        %1051 = vmatmul.mubr.f32.gmra.mxu0 %v977
        %v1052 = vpop.f32.mrf.mxu0
        %v1053 = vadd.f32 0.0, %v1052
        %v1054 = vpop.f32.mrf.mxu0
        %1055 = vmatprep.mubr.f32.mxu0 0.0
        %1056 = vmatmul.mubr.f32.gmra.mxu0 %v980
        %v1057 = vpop.f32.mrf.mxu0
        %v1058 = vadd.f32 0.0, %v1057
        %v1059 = vpop.f32.mrf.mxu0
        %1060 = vdwg.mxu0
        %v1061 = vld [vmem:[#allocation2] sm:$0xff]
        %v1062 = vld [vmem:[#allocation2 + $0x8] sm:$0xff]
        %p1063 = scmp.gt.s32.totalorder %s44, 0
        %s1064 = scalar_select %p1063, 1, 0
        %v1065 = vstv %s1064
        %vm1066 = vcmp.eq.s32.totalorder %v1065, 1
        %v1067 = vsel %vm1066, %v1053, 0.0
        %v1068 = vsel %vm1066, %v1058, 0.0
        %v1069 = vadd.f32 %v1061, %v1067
        %v1070 = vadd.f32 %v1062, %v1068
        %v1071 = vld [vmem:[%s2] sm:$0xf]
        %v1072 = vld [vmem:[%s2 + $0x4] sm:$0xf]
        %v1073 = vld [vmem:[%s2 + $0x8] sm:$0xf]
        %v1074 = vld [vmem:[%s2 + $0xc] sm:$0xf]
        %v1075 = vld [vmem:[%s2 + $0x10] sm:$0xf]
        %v1076 = vld [vmem:[%s2 + $0x14] sm:$0xf]
        %v1077 = vpack.c.bf16 %v1070, %v1069
        %v1078 = vld [vmem:[%s823] sm:$0xff]
        %v1079 = vld [vmem:[%s823 + $0x8] sm:$0xff]
        %v1080 = vld [vmem:[%s823 + $0x10] sm:$0xff]
        %v1081 = vld [vmem:[%s823 + $0x18] sm:$0xff]
        %v1082 = vld [vmem:[%s823 + $0x20] sm:$0xff]
        %v1083 = vld [vmem:[%s823 + $0x28] sm:$0xff]
        %v1090 = vunpack.c.l.b16 %v1071
        %v1091 = vunpack.c.l.b16 %v1072
        %v1092 = vunpack.c.l.b16 %v1073
        %v1093 = vunpack.c.l.b16 %v1074
        %v1094 = vunpack.c.l.b16 %v1075
        %v1095 = vunpack.c.l.b16 %v1076
        %v1096 = vpack.c.b16 %v1091, %v1090
        %v1097 = vpack.c.b16 %v1093, %v1092
        %v1098 = vpack.c.b16 %v1095, %v1094
        %vm1099 = vcmask 130048
        %v1101 = vsel %vm1099, %v1096, 0
        %v1104 = vsel %vm1099, %v1097, 0
        %v1107 = vsel %vm1099, %v1098, 0
        %1109 = vmatprep.subr.bf16.mxu0 0
        %1110 = vmatpush1.bf16.msra.mxu0 0
        %1111 = vmatprep.subr.bf16.mxu0 0
        %1112 = vmatpush1.bf16.msra.mxu0 0
        %1113 = vmatprep.subr.bf16.mxu0 0
        %1114 = vmatpush1.bf16.msra.mxu0 0
        %1115 = vmatprep.subr.bf16.mxu0 0
        %1116 = vmatpush1.bf16.msra.mxu0 0
        %1117 = vmatprep.subr.bf16.mxu0 0
        %1118 = vmatpush1.bf16.msra.mxu0 0
        %1119 = vmatprep.subr.bf16.mxu0 0
        %1120 = vmatpush1.bf16.msra.mxu0 0
        %1121 = vmatprep.subr.bf16.mxu0 0
        %1122 = vmatpush1.bf16.msra.mxu0 0
        %1123 = vmatprep.subr.bf16.mxu0 0
        %1124 = vmatpush1.bf16.msra.mxu0 %v1077
        %1125 = vmatprep.subr.bf16.mxu0 0
        %1126 = vmatpush2.bf16.msra.mxu0 0
        %1127 = vmatprep.subr.bf16.mxu0 0
        %1128 = vmatpush2.bf16.msra.mxu0 0
        %1129 = vmatprep.subr.bf16.mxu0 0
        %1130 = vmatpush2.bf16.msra.mxu0 0
        %1131 = vmatprep.subr.bf16.mxu0 0
        %1132 = vmatpush2.bf16.msra.mxu0 0
        %1133 = vmatprep.subr.bf16.mxu0 0
        %1134 = vmatpush2.bf16.msra.mxu0 0
        %1135 = vmatprep.subr.bf16.mxu0 0
        %1136 = vmatpush2.bf16.msra.mxu0 0
        %1137 = vmatprep.subr.bf16.mxu0 0
        %1138 = vmatpush2.bf16.msra.mxu0 0
        %1139 = vmatprep.subr.bf16.mxu0 0
        %1140 = vmatpush2.bf16.msra.mxu0 0
        %1141 = vmatprep.mubr.bf16.mxu0 0
        %1142 = vmatmul.mubr.bf16.gmra.mxu0 %v1101
        %v1143 = vpop.f32.mrf.mxu0
        %v1144 = vadd.f32 %v1078, %v1143
        %v1145 = vpop.f32.mrf.mxu0
        %v1146 = vpop.f32.mrf.mxu0
        %v1147 = vadd.f32 %v1079, %v1146
        %v1148 = vpop.f32.mrf.mxu0
        %1149 = vmatprep.mubr.bf16.mxu0 0
        %1150 = vmatmul.mubr.bf16.gmra.mxu0 %v1104
        %v1151 = vpop.f32.mrf.mxu0
        %v1152 = vadd.f32 %v1080, %v1151
        %v1153 = vpop.f32.mrf.mxu0
        %v1154 = vpop.f32.mrf.mxu0
        %v1155 = vadd.f32 %v1081, %v1154
        %v1156 = vpop.f32.mrf.mxu0
        %1157 = vmatprep.mubr.bf16.mxu0 0
        %1158 = vmatmul.mubr.bf16.gmra.mxu0 %v1107
        %v1159 = vpop.f32.mrf.mxu0
        %v1160 = vadd.f32 %v1082, %v1159
        %v1161 = vpop.f32.mrf.mxu0
        %v1162 = vpop.f32.mrf.mxu0
        %v1163 = vadd.f32 %v1083, %v1162
        %v1164 = vpop.f32.mrf.mxu0
        %1165 = vdwg.mxu0
        %v1166 = vmax.f32 %v1144, 0.0
        %v1167 = vmax.f32 %v1147, 0.0
        %v1168 = vmax.f32 %v1152, 0.0
        %v1169 = vmax.f32 %v1155, 0.0
        %v1170 = vmax.f32 %v1160, 0.0
        %v1171 = vmax.f32 %v1163, 0.0
        %v1172 = vld [vmem:[%s3] sm:$0xf]
        %v1173 = vld [vmem:[%s3 + $0x4] sm:$0xf]
        %v1174 = vpack.c.bf16 %v1167, %v1166
        %v1175 = vpack.c.bf16 %v1169, %v1168
        %v1176 = vpack.c.bf16 %v1171, %v1170
        %v1179 = vunpack.c.l.b16 %v1172
        %v1180 = vunpack.c.l.b16 %v1173
        %v1181 = vpack.c.b16 %v1180, %v1179
        %vm1182 = vcmask 392192
        %v1184 = vsel %vm1182, %v1181, 0
        %1186 = vmatprep.subr.bf16.mxu0 0
        %1187 = vmatpush1.bf16.msra.mxu0 0
        %1188 = vmatprep.subr.bf16.mxu0 0
        %1189 = vmatpush1.bf16.msra.mxu0 0
        %1190 = vmatprep.subr.bf16.mxu0 0
        %1191 = vmatpush1.bf16.msra.mxu0 0
        %1192 = vmatprep.subr.bf16.mxu0 0
        %1193 = vmatpush1.bf16.msra.mxu0 0
        %1194 = vmatprep.subr.bf16.mxu0 0
        %1195 = vmatpush1.bf16.msra.mxu0 0
        %1196 = vmatprep.subr.bf16.mxu0 0
        %1197 = vmatpush1.bf16.msra.mxu0 %v1176
        %1198 = vmatprep.subr.bf16.mxu0 0
        %1199 = vmatpush1.bf16.msra.mxu0 %v1175
        %1200 = vmatprep.subr.bf16.mxu0 0
        %1201 = vmatpush1.bf16.msra.mxu0 %v1174
        %1202 = vmatprep.subr.bf16.mxu0 0
        %1203 = vmatpush2.bf16.msra.mxu0 0
        %1204 = vmatprep.subr.bf16.mxu0 0
        %1205 = vmatpush2.bf16.msra.mxu0 0
        %1206 = vmatprep.subr.bf16.mxu0 0
        %1207 = vmatpush2.bf16.msra.mxu0 0
        %1208 = vmatprep.subr.bf16.mxu0 0
        %1209 = vmatpush2.bf16.msra.mxu0 0
        %1210 = vmatprep.subr.bf16.mxu0 0
        %1211 = vmatpush2.bf16.msra.mxu0 0
        %1212 = vmatprep.subr.bf16.mxu0 0
        %1213 = vmatpush2.bf16.msra.mxu0 0
        %1214 = vmatprep.subr.bf16.mxu0 0
        %1215 = vmatpush2.bf16.msra.mxu0 0
        %1216 = vmatprep.subr.bf16.mxu0 0
        %1217 = vmatpush2.bf16.msra.mxu0 0
        %1218 = vmatprep.mubr.bf16.mxu0 0
        %1219 = vmatmul.mubr.bf16.gmra.mxu0 %v1184
        %v1220 = vpop.f32.mrf.mxu0
        %v1221 = vadd.f32 0.0, %v1220
        %v1222 = vpop.f32.mrf.mxu0
        %v1223 = vpop.f32.mrf.mxu0
        %v1224 = vadd.f32 0.0, %v1223
        %v1225 = vpop.f32.mrf.mxu0
        %1226 = vdwg.mxu0
        %v1227 = vld [vmem:[%s942] sm:$0x1]
        %v1229 = vlaneseq
        %v1230 = vshrl.u32 %v1229, 7
        %v1231 = vsub.s32 0, %v1230
        %v1232 = vrot.slane %v1227, %v1231
        %v1234 = vmul.f32 %v1232, %v1069
        %v1235 = vmul.f32 %v1232, %v1070
        %v1236 = vadd.f32 %v1234, %v1221
        %v1237 = vadd.f32 %v1235, %v1224
        %v1238 = vld [vmem:[%s832] sm:$0xff]
        %v1239 = vld [vmem:[%s832 + $0x8] sm:$0xff]
        %v1240 = vld [vmem:[%s832 + $0x10] sm:$0xff]
        %v1241 = vld [vmem:[%s832 + $0x18] sm:$0xff]
        %v1242 = vld [vmem:[%s832 + $0x20] sm:$0xff]
        %v1243 = vld [vmem:[%s832 + $0x28] sm:$0xff]
        %v1244 = vld [vmem:[%s832 + $0x30] sm:$0xff]
        %v1245 = vld [vmem:[%s832 + $0x38] sm:$0xff]
        %v1246 = vld [vmem:[%s832 + $0x40] sm:$0xff]
        %v1247 = vld [vmem:[%s832 + $0x48] sm:$0xff]
        %v1248 = vld [vmem:[%s832 + $0x50] sm:$0xff]
        %v1249 = vld [vmem:[%s832 + $0x58] sm:$0xff]
        %v1250 = vld [vmem:[%s832 + $0x60] sm:$0xff]
        %v1251 = vld [vmem:[%s832 + $0x68] sm:$0xff]
        %v1252 = vld [vmem:[%s832 + $0x70] sm:$0xff]
        %v1253 = vld [vmem:[%s832 + $0x78] sm:$0xff]
        %v1254 = vld [vmem:[%s945] sm:$0x1]
        %v1256 = vlaneseq
        %v1257 = vshrl.u32 %v1256, 7
        %v1258 = vsub.s32 0, %v1257
        %v1259 = vrot.slane %v1254, %v1258
        %1261 = vmatprep.subr.mxu0 0.0
        %1262 = vmatpush1.msra.mxu0 %v1253
        %1263 = vmatprep.subr.mxu0 0.0
        %1264 = vmatpush1.msra.mxu0 %v1252
        %1265 = vmatprep.subr.mxu0 0.0
        %1266 = vmatpush1.msra.mxu0 %v1251
        %1267 = vmatprep.subr.mxu0 0.0
        %1268 = vmatpush1.msra.mxu0 %v1250
        %1269 = vmatprep.subr.mxu0 0.0
        %1270 = vmatpush1.msra.mxu0 %v1249
        %1271 = vmatprep.subr.mxu0 0.0
        %1272 = vmatpush1.msra.mxu0 %v1248
        %1273 = vmatprep.subr.mxu0 0.0
        %1274 = vmatpush1.msra.mxu0 %v1247
        %1275 = vmatprep.subr.mxu0 0.0
        %1276 = vmatpush1.msra.mxu0 %v1246
        %1277 = vmatprep.subr.mxu0 0.0
        %1278 = vmatpush1.msra.mxu0 %v1245
        %1279 = vmatprep.subr.mxu0 0.0
        %1280 = vmatpush1.msra.mxu0 %v1244
        %1281 = vmatprep.subr.mxu0 0.0
        %1282 = vmatpush1.msra.mxu0 %v1243
        %1283 = vmatprep.subr.mxu0 0.0
        %1284 = vmatpush1.msra.mxu0 %v1242
        %1285 = vmatprep.subr.mxu0 0.0
        %1286 = vmatpush1.msra.mxu0 %v1241
        %1287 = vmatprep.subr.mxu0 0.0
        %1288 = vmatpush1.msra.mxu0 %v1240
        %1289 = vmatprep.subr.mxu0 0.0
        %1290 = vmatpush1.msra.mxu0 %v1239
        %1291 = vmatprep.subr.mxu0 0.0
        %1292 = vmatpush1.msra.mxu0 %v1238
        %1293 = vmatprep.subr.mxu0 0.0
        %1294 = vmatpush2.msra.mxu0 0.0
        %1295 = vmatprep.subr.mxu0 0.0
        %1296 = vmatpush2.msra.mxu0 0.0
        %1297 = vmatprep.subr.mxu0 0.0
        %1298 = vmatpush2.msra.mxu0 0.0
        %1299 = vmatprep.subr.mxu0 0.0
        %1300 = vmatpush2.msra.mxu0 0.0
        %1301 = vmatprep.subr.mxu0 0.0
        %1302 = vmatpush2.msra.mxu0 0.0
        %1303 = vmatprep.subr.mxu0 0.0
        %1304 = vmatpush2.msra.mxu0 0.0
        %1305 = vmatprep.subr.mxu0 0.0
        %1306 = vmatpush2.msra.mxu0 0.0
        %1307 = vmatprep.subr.mxu0 0.0
        %1308 = vmatpush2.msra.mxu0 0.0
        %1309 = vmatprep.subr.mxu0 0.0
        %1310 = vmatpush2.msra.mxu0 0.0
        %1311 = vmatprep.subr.mxu0 0.0
        %1312 = vmatpush2.msra.mxu0 0.0
        %1313 = vmatprep.subr.mxu0 0.0
        %1314 = vmatpush2.msra.mxu0 0.0
        %1315 = vmatprep.subr.mxu0 0.0
        %1316 = vmatpush2.msra.mxu0 0.0
        %1317 = vmatprep.subr.mxu0 0.0
        %1318 = vmatpush2.msra.mxu0 0.0
        %1319 = vmatprep.subr.mxu0 0.0
        %1320 = vmatpush2.msra.mxu0 0.0
        %1321 = vmatprep.subr.mxu0 0.0
        %1322 = vmatpush2.msra.mxu0 0.0
        %1323 = vmatprep.subr.mxu0 0.0
        %1324 = vmatpush2.msra.mxu0 0.0
        %1325 = vmatprep.mubr.f32.mxu0 0.0
        %1326 = vmatmul.mubr.f32.gmra.mxu0 %v1236
        %v1327 = vpop.f32.mrf.mxu0
        %v1328 = vadd.f32 %v1259, %v1327
        %v1329 = vpop.f32.mrf.mxu0
        %1330 = vmatprep.mubr.f32.mxu0 0.0
        %1331 = vmatmul.mubr.f32.gmra.mxu0 %v1237
        %v1332 = vpop.f32.mrf.mxu0
        %v1333 = vadd.f32 %v1259, %v1332
        %v1334 = vpop.f32.mrf.mxu0
        %1335 = vdwg.mxu0
        %v1336 = vld [vmem:[%s948] sm:$0x1]
        %v1338 = vlaneseq
        %v1339 = vshrl.u32 %v1338, 7
        %v1340 = vsub.s32 0, %v1339
        %v1341 = vrot.slane %v1336, %v1340
        %v1343 = vmul.f32 %v1328, %v1341
        %v1344 = vmul.f32 %v1333, %v1341
        %v1345 = vld [vmem:[%s951] sm:$0x1]
        %v1347 = vlaneseq
        %v1348 = vshrl.u32 %v1347, 7
        %v1349 = vsub.s32 0, %v1348
        %v1350 = vrot.slane %v1345, %v1349
        %v1352 = vadd.f32 %v1343, %v1350
        %v1353 = vadd.f32 %v1344, %v1350
        %v1354 = vmax.f32 %v1352, 0.0
        %v1355 = vmax.f32 %v1353, 0.0
        %v1356 = vld [vmem:[%s841] sm:$0xff]
        %v1357 = vld [vmem:[%s841 + $0x8] sm:$0xff]
        %v1358 = vld [vmem:[%s841 + $0x10] sm:$0xff]
        %v1359 = vld [vmem:[%s841 + $0x18] sm:$0xff]
        %v1360 = vld [vmem:[%s841 + $0x20] sm:$0xff]
        %v1361 = vld [vmem:[%s841 + $0x28] sm:$0xff]
        %v1362 = vld [vmem:[%s841 + $0x30] sm:$0xff]
        %v1363 = vld [vmem:[%s841 + $0x38] sm:$0xff]
        %v1364 = vld [vmem:[%s841 + $0x40] sm:$0xff]
        %v1365 = vld [vmem:[%s841 + $0x48] sm:$0xff]
        %v1366 = vld [vmem:[%s841 + $0x50] sm:$0xff]
        %v1367 = vld [vmem:[%s841 + $0x58] sm:$0xff]
        %v1368 = vld [vmem:[%s841 + $0x60] sm:$0xff]
        %v1369 = vld [vmem:[%s841 + $0x68] sm:$0xff]
        %v1370 = vld [vmem:[%s841 + $0x70] sm:$0xff]
        %v1371 = vld [vmem:[%s841 + $0x78] sm:$0xff]
        %v1372 = vld [vmem:[%s954] sm:$0x1]
        %v1374 = vlaneseq
        %v1375 = vshrl.u32 %v1374, 7
        %v1376 = vsub.s32 0, %v1375
        %v1377 = vrot.slane %v1372, %v1376
        %1379 = vmatprep.subr.mxu0 0.0
        %1380 = vmatpush1.msra.mxu0 %v1371
        %1381 = vmatprep.subr.mxu0 0.0
        %1382 = vmatpush1.msra.mxu0 %v1370
        %1383 = vmatprep.subr.mxu0 0.0
        %1384 = vmatpush1.msra.mxu0 %v1369
        %1385 = vmatprep.subr.mxu0 0.0
        %1386 = vmatpush1.msra.mxu0 %v1368
        %1387 = vmatprep.subr.mxu0 0.0
        %1388 = vmatpush1.msra.mxu0 %v1367
        %1389 = vmatprep.subr.mxu0 0.0
        %1390 = vmatpush1.msra.mxu0 %v1366
        %1391 = vmatprep.subr.mxu0 0.0
        %1392 = vmatpush1.msra.mxu0 %v1365
        %1393 = vmatprep.subr.mxu0 0.0
        %1394 = vmatpush1.msra.mxu0 %v1364
        %1395 = vmatprep.subr.mxu0 0.0
        %1396 = vmatpush1.msra.mxu0 %v1363
        %1397 = vmatprep.subr.mxu0 0.0
        %1398 = vmatpush1.msra.mxu0 %v1362
        %1399 = vmatprep.subr.mxu0 0.0
        %1400 = vmatpush1.msra.mxu0 %v1361
        %1401 = vmatprep.subr.mxu0 0.0
        %1402 = vmatpush1.msra.mxu0 %v1360
        %1403 = vmatprep.subr.mxu0 0.0
        %1404 = vmatpush1.msra.mxu0 %v1359
        %1405 = vmatprep.subr.mxu0 0.0
        %1406 = vmatpush1.msra.mxu0 %v1358
        %1407 = vmatprep.subr.mxu0 0.0
        %1408 = vmatpush1.msra.mxu0 %v1357
        %1409 = vmatprep.subr.mxu0 0.0
        %1410 = vmatpush1.msra.mxu0 %v1356
        %1411 = vmatprep.subr.mxu0 0.0
        %1412 = vmatpush2.msra.mxu0 0.0
        %1413 = vmatprep.subr.mxu0 0.0
        %1414 = vmatpush2.msra.mxu0 0.0
        %1415 = vmatprep.subr.mxu0 0.0
        %1416 = vmatpush2.msra.mxu0 0.0
        %1417 = vmatprep.subr.mxu0 0.0
        %1418 = vmatpush2.msra.mxu0 0.0
        %1419 = vmatprep.subr.mxu0 0.0
        %1420 = vmatpush2.msra.mxu0 0.0
        %1421 = vmatprep.subr.mxu0 0.0
        %1422 = vmatpush2.msra.mxu0 0.0
        %1423 = vmatprep.subr.mxu0 0.0
        %1424 = vmatpush2.msra.mxu0 0.0
        %1425 = vmatprep.subr.mxu0 0.0
        %1426 = vmatpush2.msra.mxu0 0.0
        %1427 = vmatprep.subr.mxu0 0.0
        %1428 = vmatpush2.msra.mxu0 0.0
        %1429 = vmatprep.subr.mxu0 0.0
        %1430 = vmatpush2.msra.mxu0 0.0
        %1431 = vmatprep.subr.mxu0 0.0
        %1432 = vmatpush2.msra.mxu0 0.0
        %1433 = vmatprep.subr.mxu0 0.0
        %1434 = vmatpush2.msra.mxu0 0.0
        %1435 = vmatprep.subr.mxu0 0.0
        %1436 = vmatpush2.msra.mxu0 0.0
        %1437 = vmatprep.subr.mxu0 0.0
        %1438 = vmatpush2.msra.mxu0 0.0
        %1439 = vmatprep.subr.mxu0 0.0
        %1440 = vmatpush2.msra.mxu0 0.0
        %1441 = vmatprep.subr.mxu0 0.0
        %1442 = vmatpush2.msra.mxu0 0.0
        %1443 = vmatprep.mubr.f32.mxu0 0.0
        %1444 = vmatmul.mubr.f32.gmra.mxu0 %v1354
        %v1445 = vpop.f32.mrf.mxu0
        %v1446 = vadd.f32 %v1377, %v1445
        %v1447 = vpop.f32.mrf.mxu0
        %1448 = vmatprep.mubr.f32.mxu0 0.0
        %1449 = vmatmul.mubr.f32.gmra.mxu0 %v1355
        %v1450 = vpop.f32.mrf.mxu0
        %v1451 = vadd.f32 %v1377, %v1450
        %v1452 = vpop.f32.mrf.mxu0
        %1453 = vdwg.mxu0
        %v1454 = vld [vmem:[%s957] sm:$0x1]
        %v1456 = vlaneseq
        %v1457 = vshrl.u32 %v1456, 7
        %v1458 = vsub.s32 0, %v1457
        %v1459 = vrot.slane %v1454, %v1458
        %v1461 = vmul.f32 %v1446, %v1459
        %v1462 = vmul.f32 %v1451, %v1459
        %v1463 = vld [vmem:[%s960] sm:$0x1]
        %v1465 = vlaneseq
        %v1466 = vshrl.u32 %v1465, 7
        %v1467 = vsub.s32 0, %v1466
        %v1468 = vrot.slane %v1463, %v1467
        %v1470 = vadd.f32 %v1461, %v1468
        %v1471 = vadd.f32 %v1462, %v1468
        %p1472 = scmp.lt.s32.totalorder %s44, 2
        %v1473 = vmax.f32 %v1470, 0.0
        %v1474 = vmax.f32 %v1471, 0.0
        %s1475 = scalar_select %p1472, 1, 0
        %v1476 = vstv %s1475
        %vm1477 = vcmp.eq.s32.totalorder %v1476, 1
        %v1478 = vsel %vm1477, %v1473, %v1470
        %v1479 = vsel %vm1477, %v1474, %v1471
        %1480 = vst [vmem:[#allocation2] sm:$0xff] %v1478
        %1481 = vst [vmem:[#allocation2 + $0x8] sm:$0xff] %v1479
        %1482 = vst [vmem:[#allocation15] sm:$0xff] %v1478
        %1483 = vst [vmem:[#allocation15 + $0x8] sm:$0xff] %v1479
        %p1484 = scmp.ge.s32.totalorder %s44, 1
        %p1485 = pnand %p1484, %p1472
        %p1486 = pneg %p1485
        // Predicated region
        $region145: #{tpu_custom_call.1} parent=115 // pred_check
          _
        $region146: #{tpu_custom_call.1} parent=115 // pred_check_branch
          %1488 = sbr.rel (%p1485) target = $region148
        $region147: #{tpu_custom_call.1} parent=115 // pred_region
          %v1489 = vld [vmem:[%s5] sm:$0x3]
          %v1490 = vld [vmem:[#allocation3] sm:$0x3]
          %v1492 = vsel %vm1099, %v1489, 0
          %1494 = vmatprep.subr.mxu0 0.0
          %1495 = vmatpush1.msra.mxu0 0.0
          %1496 = vmatprep.subr.mxu0 0.0
          %1497 = vmatpush1.msra.mxu0 0.0
          %1498 = vmatprep.subr.mxu0 0.0
          %1499 = vmatpush1.msra.mxu0 0.0
          %1500 = vmatprep.subr.mxu0 0.0
          %1501 = vmatpush1.msra.mxu0 0.0
          %1502 = vmatprep.subr.mxu0 0.0
          %1503 = vmatpush1.msra.mxu0 0.0
          %1504 = vmatprep.subr.mxu0 0.0
          %1505 = vmatpush1.msra.mxu0 0.0
          %1506 = vmatprep.subr.mxu0 0.0
          %1507 = vmatpush1.msra.mxu0 0.0
          %1508 = vmatprep.subr.mxu0 0.0
          %1509 = vmatpush1.msra.mxu0 0.0
          %1510 = vmatprep.subr.mxu0 0.0
          %1511 = vmatpush1.msra.mxu0 0.0
          %1512 = vmatprep.subr.mxu0 0.0
          %1513 = vmatpush1.msra.mxu0 0.0
          %1514 = vmatprep.subr.mxu0 0.0
          %1515 = vmatpush1.msra.mxu0 0.0
          %1516 = vmatprep.subr.mxu0 0.0
          %1517 = vmatpush1.msra.mxu0 0.0
          %1518 = vmatprep.subr.mxu0 0.0
          %1519 = vmatpush1.msra.mxu0 0.0
          %1520 = vmatprep.subr.mxu0 0.0
          %1521 = vmatpush1.msra.mxu0 0.0
          %1522 = vmatprep.subr.mxu0 0.0
          %1523 = vmatpush1.msra.mxu0 %v1479
          %1524 = vmatprep.subr.mxu0 0.0
          %1525 = vmatpush1.msra.mxu0 %v1478
          %1526 = vmatprep.subr.mxu0 0.0
          %1527 = vmatpush2.msra.mxu0 0.0
          %1528 = vmatprep.subr.mxu0 0.0
          %1529 = vmatpush2.msra.mxu0 0.0
          %1530 = vmatprep.subr.mxu0 0.0
          %1531 = vmatpush2.msra.mxu0 0.0
          %1532 = vmatprep.subr.mxu0 0.0
          %1533 = vmatpush2.msra.mxu0 0.0
          %1534 = vmatprep.subr.mxu0 0.0
          %1535 = vmatpush2.msra.mxu0 0.0
          %1536 = vmatprep.subr.mxu0 0.0
          %1537 = vmatpush2.msra.mxu0 0.0
          %1538 = vmatprep.subr.mxu0 0.0
          %1539 = vmatpush2.msra.mxu0 0.0
          %1540 = vmatprep.subr.mxu0 0.0
          %1541 = vmatpush2.msra.mxu0 0.0
          %1542 = vmatprep.subr.mxu0 0.0
          %1543 = vmatpush2.msra.mxu0 0.0
          %1544 = vmatprep.subr.mxu0 0.0
          %1545 = vmatpush2.msra.mxu0 0.0
          %1546 = vmatprep.subr.mxu0 0.0
          %1547 = vmatpush2.msra.mxu0 0.0
          %1548 = vmatprep.subr.mxu0 0.0
          %1549 = vmatpush2.msra.mxu0 0.0
          %1550 = vmatprep.subr.mxu0 0.0
          %1551 = vmatpush2.msra.mxu0 0.0
          %1552 = vmatprep.subr.mxu0 0.0
          %1553 = vmatpush2.msra.mxu0 0.0
          %1554 = vmatprep.subr.mxu0 0.0
          %1555 = vmatpush2.msra.mxu0 0.0
          %1556 = vmatprep.subr.mxu0 0.0
          %1557 = vmatpush2.msra.mxu0 0.0
          %1558 = vmatprep.mubr.f32.mxu0 0.0
          %1559 = vmatmul.mubr.f32.gmra.mxu0 %v1492
          %v1560 = vpop.f32.mrf.mxu0
          %v1561 = vadd.f32 %v1490, %v1560
          %v1562 = vpop.f32.mrf.mxu0
          %1563 = vdwg.mxu0
          %v1564 = vld [vmem:[#allocation12] sm:$0xff]
          %v1565 = vld [vmem:[#allocation12 + $0x8] sm:$0xff]
          %v1566 = vld [vmem:[#allocation12 + $0x10] sm:$0xff]
          %v1567 = vld [vmem:[#allocation12 + $0x18] sm:$0xff]
          %v1568 = vld [vmem:[#allocation12 + $0x20] sm:$0xff]
          %v1569 = vld [vmem:[#allocation12 + $0x28] sm:$0xff]
          %v1570 = vld [vmem:[#allocation12 + $0x30] sm:$0xff]
          %v1571 = vld [vmem:[#allocation12 + $0x38] sm:$0xff]
          %v1572 = vld [vmem:[#allocation12 + $0x40] sm:$0xff]
          %v1573 = vld [vmem:[#allocation12 + $0x48] sm:$0xff]
          %v1574 = vld [vmem:[#allocation12 + $0x50] sm:$0xff]
          %v1575 = vld [vmem:[#allocation12 + $0x58] sm:$0xff]
          %v1576 = vld [vmem:[#allocation12 + $0x60] sm:$0xff]
          %v1577 = vld [vmem:[#allocation12 + $0x68] sm:$0xff]
          %v1578 = vld [vmem:[#allocation12 + $0x70] sm:$0xff]
          %v1579 = vld [vmem:[#allocation12 + $0x78] sm:$0xff]
          %v1580 = vld [vmem:[%s17] sm:$0x1]
          %v1582 = vlaneseq
          %v1583 = vshrl.u32 %v1582, 7
          %v1584 = vsub.s32 0, %v1583
          %v1585 = vrot.slane %v1580, %v1584
          %1587 = vmatprep.subr.mxu0 0.0
          %1588 = vmatpush1.msra.mxu0 %v1579
          %1589 = vmatprep.subr.mxu0 0.0
          %1590 = vmatpush1.msra.mxu0 %v1578
          %1591 = vmatprep.subr.mxu0 0.0
          %1592 = vmatpush1.msra.mxu0 %v1577
          %1593 = vmatprep.subr.mxu0 0.0
          %1594 = vmatpush1.msra.mxu0 %v1576
          %1595 = vmatprep.subr.mxu0 0.0
          %1596 = vmatpush1.msra.mxu0 %v1575
          %1597 = vmatprep.subr.mxu0 0.0
          %1598 = vmatpush1.msra.mxu0 %v1574
          %1599 = vmatprep.subr.mxu0 0.0
          %1600 = vmatpush1.msra.mxu0 %v1573
          %1601 = vmatprep.subr.mxu0 0.0
          %1602 = vmatpush1.msra.mxu0 %v1572
          %1603 = vmatprep.subr.mxu0 0.0
          %1604 = vmatpush1.msra.mxu0 %v1571
          %1605 = vmatprep.subr.mxu0 0.0
          %1606 = vmatpush1.msra.mxu0 %v1570
          %1607 = vmatprep.subr.mxu0 0.0
          %1608 = vmatpush1.msra.mxu0 %v1569
          %1609 = vmatprep.subr.mxu0 0.0
          %1610 = vmatpush1.msra.mxu0 %v1568
          %1611 = vmatprep.subr.mxu0 0.0
          %1612 = vmatpush1.msra.mxu0 %v1567
          %1613 = vmatprep.subr.mxu0 0.0
          %1614 = vmatpush1.msra.mxu0 %v1566
          %1615 = vmatprep.subr.mxu0 0.0
          %1616 = vmatpush1.msra.mxu0 %v1565
          %1617 = vmatprep.subr.mxu0 0.0
          %1618 = vmatpush1.msra.mxu0 %v1564
          %1619 = vmatprep.subr.mxu0 0.0
          %1620 = vmatpush2.msra.mxu0 0.0
          %1621 = vmatprep.subr.mxu0 0.0
          %1622 = vmatpush2.msra.mxu0 0.0
          %1623 = vmatprep.subr.mxu0 0.0
          %1624 = vmatpush2.msra.mxu0 0.0
          %1625 = vmatprep.subr.mxu0 0.0
          %1626 = vmatpush2.msra.mxu0 0.0
          %1627 = vmatprep.subr.mxu0 0.0
          %1628 = vmatpush2.msra.mxu0 0.0
          %1629 = vmatprep.subr.mxu0 0.0
          %1630 = vmatpush2.msra.mxu0 0.0
          %1631 = vmatprep.subr.mxu0 0.0
          %1632 = vmatpush2.msra.mxu0 0.0
          %1633 = vmatprep.subr.mxu0 0.0
          %1634 = vmatpush2.msra.mxu0 0.0
          %1635 = vmatprep.subr.mxu0 0.0
          %1636 = vmatpush2.msra.mxu0 0.0
          %1637 = vmatprep.subr.mxu0 0.0
          %1638 = vmatpush2.msra.mxu0 0.0
          %1639 = vmatprep.subr.mxu0 0.0
          %1640 = vmatpush2.msra.mxu0 0.0
          %1641 = vmatprep.subr.mxu0 0.0
          %1642 = vmatpush2.msra.mxu0 0.0
          %1643 = vmatprep.subr.mxu0 0.0
          %1644 = vmatpush2.msra.mxu0 0.0
          %1645 = vmatprep.subr.mxu0 0.0
          %1646 = vmatpush2.msra.mxu0 0.0
          %1647 = vmatprep.subr.mxu0 0.0
          %1648 = vmatpush2.msra.mxu0 0.0
          %1649 = vmatprep.subr.mxu0 0.0
          %1650 = vmatpush2.msra.mxu0 0.0
          %1651 = vmatprep.mubr.f32.mxu0 0.0
          %1652 = vmatmul.mubr.f32.gmra.mxu0 %v1561
          %v1653 = vpop.f32.mrf.mxu0
          %v1654 = vadd.f32 %v1585, %v1653
          %v1655 = vpop.f32.mrf.mxu0
          %1656 = vdwg.mxu0
          %v1657 = vld [vmem:[%s18] sm:$0x1]
          %v1659 = vlaneseq
          %v1660 = vshrl.u32 %v1659, 7
          %v1661 = vsub.s32 0, %v1660
          %v1662 = vrot.slane %v1657, %v1661
          %v1664 = vmul.f32 %v1654, %v1662
          %v1665 = vld [vmem:[%s19] sm:$0x1]
          %v1667 = vlaneseq
          %v1668 = vshrl.u32 %v1667, 7
          %v1669 = vsub.s32 0, %v1668
          %v1670 = vrot.slane %v1665, %v1669
          %v1672 = vadd.f32 %v1664, %v1670
          %v1673 = vmax.f32 %v1672, 0.0
          %v1674 = vld [vmem:[#allocation13] sm:$0xff]
          %v1675 = vld [vmem:[#allocation13 + $0x8] sm:$0xff]
          %v1676 = vld [vmem:[#allocation13 + $0x10] sm:$0xff]
          %v1677 = vld [vmem:[#allocation13 + $0x18] sm:$0xff]
          %v1678 = vld [vmem:[#allocation13 + $0x20] sm:$0xff]
          %v1679 = vld [vmem:[#allocation13 + $0x28] sm:$0xff]
          %v1680 = vld [vmem:[#allocation13 + $0x30] sm:$0xff]
          %v1681 = vld [vmem:[#allocation13 + $0x38] sm:$0xff]
          %v1682 = vld [vmem:[#allocation13 + $0x40] sm:$0xff]
          %v1683 = vld [vmem:[#allocation13 + $0x48] sm:$0xff]
          %v1684 = vld [vmem:[#allocation13 + $0x50] sm:$0xff]
          %v1685 = vld [vmem:[#allocation13 + $0x58] sm:$0xff]
          %v1686 = vld [vmem:[#allocation13 + $0x60] sm:$0xff]
          %v1687 = vld [vmem:[#allocation13 + $0x68] sm:$0xff]
          %v1688 = vld [vmem:[#allocation13 + $0x70] sm:$0xff]
          %v1689 = vld [vmem:[#allocation13 + $0x78] sm:$0xff]
          %v1690 = vld [vmem:[%s21] sm:$0x1]
          %v1692 = vlaneseq
          %v1693 = vshrl.u32 %v1692, 7
          %v1694 = vsub.s32 0, %v1693
          %v1695 = vrot.slane %v1690, %v1694
          %1697 = vmatprep.subr.mxu0 0.0
          %1698 = vmatpush1.msra.mxu0 %v1689
          %1699 = vmatprep.subr.mxu0 0.0
          %1700 = vmatpush1.msra.mxu0 %v1688
          %1701 = vmatprep.subr.mxu0 0.0
          %1702 = vmatpush1.msra.mxu0 %v1687
          %1703 = vmatprep.subr.mxu0 0.0
          %1704 = vmatpush1.msra.mxu0 %v1686
          %1705 = vmatprep.subr.mxu0 0.0
          %1706 = vmatpush1.msra.mxu0 %v1685
          %1707 = vmatprep.subr.mxu0 0.0
          %1708 = vmatpush1.msra.mxu0 %v1684
          %1709 = vmatprep.subr.mxu0 0.0
          %1710 = vmatpush1.msra.mxu0 %v1683
          %1711 = vmatprep.subr.mxu0 0.0
          %1712 = vmatpush1.msra.mxu0 %v1682
          %1713 = vmatprep.subr.mxu0 0.0
          %1714 = vmatpush1.msra.mxu0 %v1681
          %1715 = vmatprep.subr.mxu0 0.0
          %1716 = vmatpush1.msra.mxu0 %v1680
          %1717 = vmatprep.subr.mxu0 0.0
          %1718 = vmatpush1.msra.mxu0 %v1679
          %1719 = vmatprep.subr.mxu0 0.0
          %1720 = vmatpush1.msra.mxu0 %v1678
          %1721 = vmatprep.subr.mxu0 0.0
          %1722 = vmatpush1.msra.mxu0 %v1677
          %1723 = vmatprep.subr.mxu0 0.0
          %1724 = vmatpush1.msra.mxu0 %v1676
          %1725 = vmatprep.subr.mxu0 0.0
          %1726 = vmatpush1.msra.mxu0 %v1675
          %1727 = vmatprep.subr.mxu0 0.0
          %1728 = vmatpush1.msra.mxu0 %v1674
          %1729 = vmatprep.subr.mxu0 0.0
          %1730 = vmatpush2.msra.mxu0 0.0
          %1731 = vmatprep.subr.mxu0 0.0
          %1732 = vmatpush2.msra.mxu0 0.0
          %1733 = vmatprep.subr.mxu0 0.0
          %1734 = vmatpush2.msra.mxu0 0.0
          %1735 = vmatprep.subr.mxu0 0.0
          %1736 = vmatpush2.msra.mxu0 0.0
          %1737 = vmatprep.subr.mxu0 0.0
          %1738 = vmatpush2.msra.mxu0 0.0
          %1739 = vmatprep.subr.mxu0 0.0
          %1740 = vmatpush2.msra.mxu0 0.0
          %1741 = vmatprep.subr.mxu0 0.0
          %1742 = vmatpush2.msra.mxu0 0.0
          %1743 = vmatprep.subr.mxu0 0.0
          %1744 = vmatpush2.msra.mxu0 0.0
          %1745 = vmatprep.subr.mxu0 0.0
          %1746 = vmatpush2.msra.mxu0 0.0
          %1747 = vmatprep.subr.mxu0 0.0
          %1748 = vmatpush2.msra.mxu0 0.0
          %1749 = vmatprep.subr.mxu0 0.0
          %1750 = vmatpush2.msra.mxu0 0.0
          %1751 = vmatprep.subr.mxu0 0.0
          %1752 = vmatpush2.msra.mxu0 0.0
          %1753 = vmatprep.subr.mxu0 0.0
          %1754 = vmatpush2.msra.mxu0 0.0
          %1755 = vmatprep.subr.mxu0 0.0
          %1756 = vmatpush2.msra.mxu0 0.0
          %1757 = vmatprep.subr.mxu0 0.0
          %1758 = vmatpush2.msra.mxu0 0.0
          %1759 = vmatprep.subr.mxu0 0.0
          %1760 = vmatpush2.msra.mxu0 0.0
          %1761 = vmatprep.mubr.f32.mxu0 0.0
          %1762 = vmatmul.mubr.f32.gmra.mxu0 %v1673
          %v1763 = vpop.f32.mrf.mxu0
          %v1764 = vadd.f32 %v1695, %v1763
          %v1765 = vpop.f32.mrf.mxu0
          %1766 = vdwg.mxu0
          %v1767 = vld [vmem:[%s22] sm:$0x1]
          %v1769 = vlaneseq
          %v1770 = vshrl.u32 %v1769, 7
          %v1771 = vsub.s32 0, %v1770
          %v1772 = vrot.slane %v1767, %v1771
          %v1774 = vmul.f32 %v1764, %v1772
          %v1775 = vld [vmem:[%s23] sm:$0x1]
          %v1777 = vlaneseq
          %v1778 = vshrl.u32 %v1777, 7
          %v1779 = vsub.s32 0, %v1778
          %v1780 = vrot.slane %v1775, %v1779
          %v1782 = vadd.f32 %v1774, %v1780
          %v1783 = vmax.f32 %v1782, 0.0
          %1784 = vst [vmem:[#allocation3] sm:$0x3] %v1783
        $region148: #{tpu_custom_call.1} parent=115 // pred_fallthru
          _
        // Predicated region
        $region149: #{tpu_custom_call.1} parent=115 // pred_check
          %p1785 = pneg %p611
        $region150: #{tpu_custom_call.1} parent=115 // pred_check_branch
          %1787 = sbr.rel (%p1785) target = $region152
        $region151: #{tpu_custom_call.1} parent=115 // pred_region
          %s1789 = ssub.s32 256, 256
          %1790 = vsyncadd [#allocation6], %s1789
          %s1791 = sshll.u32 [#allocation15], 4
          %s1792 = int_to_ptr.vmem [resolvable:$true] %s1791
          %1797 = dma.vmem_to_hbm [thread:$0]  %s1792, 256, %s24, [#allocation6], 128, 128, 8
        $region152: #{tpu_custom_call.1} parent=115 // pred_fallthru
          _
        // Predicated region
        $region153: #{tpu_custom_call.1} parent=115 // pred_check
          %p1798 = pneg %p611
        $region154: #{tpu_custom_call.1} parent=115 // pred_check_branch
          %1800 = sbr.rel (%p1798) target = $region156
        $region155: #{tpu_custom_call.1} parent=115 // pred_region
          %1801 = dma.done [#allocation6], 256
        $region156: #{tpu_custom_call.1} parent=115 // pred_fallthru
          _
      $region116: #{tpu_custom_call.1} parent=5 // pred_fallthru
        _
      %p1802 = scmp.le.s32.totalorder 2, %s39
      // Predicated region
      $region157: #{tpu_custom_call.1} parent=5 // pred_check
        %p1803 = pneg %p1802
      $region158: #{tpu_custom_call.1} parent=5 // pred_check_branch
        %1805 = sbr.rel (%p1803) target = $region160
      $region159: #{tpu_custom_call.1} parent=5 // pred_region
        %s1806 = ssub.s32 %s39, 2
      $region160: #{tpu_custom_call.1} parent=5 // pred_fallthru
        _
    $region6: #{tpu_custom_call.1} parent=1 // loop_footer
      %s43 = sadd.s32 1, %s39
    $region7: #{tpu_custom_call.1} parent=1 // loop_footer_branch
      %38 = sbr.rel target = $region3
    $region8: #{tpu_custom_call.1} parent=1 // loop_exit
      _
    %1807 = vsyncpa [#allocation5], 1
    %s1808 = scalar_lea.sflag [#allocation5], 1
    %1809 = vsyncpa %s1808, 1
    %1810 = vsyncpa [#allocation8], 1
    %s1811 = scalar_lea.sflag [#allocation8], 1
    %1812 = vsyncpa %s1811, 1
    %1813 = vsyncpa [#allocation11], 1
    %s1814 = scalar_lea.sflag [#allocation11], 1
    %1815 = vsyncpa %s1814, 1
    %1816 = vsyncpa [#allocation14], 1
    %1817 = vsyncpa [#allocation6], 1
    %s1818 = scalar_lea.sflag [#allocation6], 1
    %1819 = vsyncpa %s1818, 1

</llo_original>
